<compile_context>
chip_gen: v6e
topology: v6e:2x2x1
jax: 0.10.0
libtpu: 0.0.40
codegen_flags: <defaults>
</compile_context>

<pallas_src>
import functools

import jax
import jax.numpy as jnp
from jax import lax
from jax.experimental import pallas as pl
from jax.experimental.pallas import tpu as pltpu


# ----------------------------- tiling helpers ------------------------------

def _row_tile(m: int, max_rows: int = 256) -> int:
    """Row tile that divides m and satisfies the (8, 128) block rule."""
    if m % 8 != 0 or m <= max_rows:
        return m
    t = (min(m, max_rows) // 8) * 8
    while m % t != 0:
        t -= 8
    return t


def _batch_tile(batch: int, feat: int, itemsize: int,
                target_bytes: int = 2 * 1024 * 1024) -> int:
    """Samples per block for the fused residual kernel (lane-dense, v7x-safe)."""
    if batch % 8 != 0:
        return batch                      # full-batch block is always a legal shape
    cap = max(8, (target_bytes // max(1, feat * itemsize)) // 8 * 8)
    bt = (min(batch, cap) // 8) * 8
    while batch % bt != 0:
        bt -= 8
    # keep >= 2 grid steps when possible so both v7x TensorCores get work
    if bt == batch and batch >= 16 and (batch // 2) % 8 == 0:
        bt = batch // 2
    return bt


# ------------------------------- kernels ------------------------------------

def _layernorm_kernel(x_ref, w_ref, b_ref, o_ref, *, eps):
    x = x_ref[...].astype(jnp.float32)
    mu = jnp.mean(x, axis=-1, keepdims=True)
    xc = x - mu
    var = jnp.mean(xc * xc, axis=-1, keepdims=True)
    y = xc * lax.rsqrt(var + eps)
    y = y * w_ref[...].astype(jnp.float32) + b_ref[...].astype(jnp.float32)
    o_ref[...] = y.astype(o_ref.dtype)


def layernorm(x2d, weight, bias, *, eps=1e-5):
    m, d = x2d.shape
    tm = _row_tile(m)
    return pl.pallas_call(
        functools.partial(_layernorm_kernel, eps=eps),
        out_shape=jax.ShapeDtypeStruct((m, d), x2d.dtype),
        grid=(m // tm,),
        in_specs=[
            pl.BlockSpec((tm, d), lambda i: (i, 0)),
            pl.BlockSpec((1, d), lambda i: (0, 0)),
            pl.BlockSpec((1, d), lambda i: (0, 0)),
        ],
        out_specs=pl.BlockSpec((tm, d), lambda i: (i, 0)),
        compiler_params=pltpu.CompilerParams(dimension_semantics=("parallel",)),
    )(x2d, weight.reshape(1, d), bias.reshape(1, d))


def _linear_kernel(x_ref, w_ref, b_ref, o_ref, *, activation):
    y = jnp.dot(x_ref[...], w_ref[...], preferred_element_type=jnp.float32)
    y = y + b_ref[...].astype(jnp.float32)
    if activation == "gelu":
        # TODO(synk): torch nn.GELU defaults to the exact erf form; tanh
        # approximation is used here (Mosaic-safe), reference matches it.
        y = jax.nn.gelu(y, approximate=True)
    o_ref[...] = y.astype(o_ref.dtype)


def linear(x2d, weight, bias, *, activation=None):
    m, k = x2d.shape
    k2, n = weight.shape
    assert k == k2
    tm = _row_tile(m)
    return pl.pallas_call(
        functools.partial(_linear_kernel, activation=activation),
        out_shape=jax.ShapeDtypeStruct((m, n), x2d.dtype),
        grid=(m // tm,),
        in_specs=[
            pl.BlockSpec((tm, k), lambda i: (i, 0)),
            pl.BlockSpec((k, n), lambda i: (0, 0)),
            pl.BlockSpec((1, n), lambda i: (0, 0)),
        ],
        out_specs=pl.BlockSpec((tm, n), lambda i: (i, 0)),
        compiler_params=pltpu.CompilerParams(dimension_semantics=("parallel",)),
    )(x2d, weight, bias.reshape(1, n))


def _attention_kernel(q_ref, k_ref, v_ref, o_ref, *, scale):
    q = q_ref[...].astype(jnp.float32)            # (N, hd)
    k = k_ref[...].astype(jnp.float32)            # (N, hd)
    s = lax.dot_general(q, k, (((1,), (1,)), ((), ())),
                        preferred_element_type=jnp.float32) * scale
    s = s - jnp.max(s, axis=-1, keepdims=True)
    p = jnp.exp(s)
    p = p / jnp.sum(p, axis=-1, keepdims=True)
    o = jnp.dot(p.astype(v_ref.dtype), v_ref[...],
                preferred_element_type=jnp.float32)
    o_ref[...] = o.astype(o_ref.dtype)


def attention_core(q, k, v, *, scale):
    B, H, N, hd = q.shape
    spec = pl.BlockSpec((None, None, N, hd), lambda b, h: (b, h, 0, 0))
    return pl.pallas_call(
        functools.partial(_attention_kernel, scale=scale),
        out_shape=jax.ShapeDtypeStruct((B, H, N, hd), q.dtype),
        grid=(B, H),
        in_specs=[spec, spec, spec],
        out_specs=spec,
        compiler_params=pltpu.CompilerParams(
            dimension_semantics=("parallel", "parallel")),
    )(q, k, v)


def _residual_drop_path_kernel(x_ref, y_ref, s_ref, o_ref):
    scale = s_ref[...].astype(x_ref.dtype)        # (Bt, 1) -> broadcast over lanes
    o_ref[...] = x_ref[...] + y_ref[...] * scale


def residual_drop_path(x, branch, scale):
    """x + scale[:, None, None] * branch — fused residual + stochastic depth."""
    B = x.shape[0]
    feat = 1
    for d in x.shape[1:]:
        feat *= d
    xf = x.reshape(B, feat)                       # lane-dense: feat = N*D on lanes
    yf = branch.reshape(B, feat)
    sf = scale.reshape(B, 1).astype(jnp.float32)
    bt = _batch_tile(B, feat, xf.dtype.itemsize)
    out = pl.pallas_call(
        _residual_drop_path_kernel,
        out_shape=jax.ShapeDtypeStruct((B, feat), x.dtype),
        grid=(B // bt,),
        in_specs=[
            pl.BlockSpec((bt, feat), lambda i: (i, 0)),
            pl.BlockSpec((bt, feat), lambda i: (i, 0)),
            pl.BlockSpec((bt, 1), lambda i: (i, 0)),
        ],
        out_specs=pl.BlockSpec((bt, feat), lambda i: (i, 0)),
        compiler_params=pltpu.CompilerParams(dimension_semantics=("parallel",)),
    )(xf, yf, sf)
    return out.reshape(x.shape)


# ------------------------------ Block forward -------------------------------

def init_block_params(key, dim, mlp_ratio=4.0, qkv_bias=False, dtype=jnp.float32):
    hidden = int(dim * mlp_ratio)
    ks = jax.random.split(key, 10)

    def dense(k, fan_in, shape):
        return (jax.random.normal(k, shape, dtype) * (fan_in ** -0.5)).astype(dtype)

    return {
        "norm1_w": 1.0 + 0.1 * jax.random.normal(ks[0], (dim,), dtype),
        "norm1_b": 0.1 * jax.random.normal(ks[1], (dim,), dtype),
        "norm2_w": 1.0 + 0.1 * jax.random.normal(ks[2], (dim,), dtype),
        "norm2_b": 0.1 * jax.random.normal(ks[3], (dim,), dtype),
        "qkv_w": dense(ks[4], dim, (dim, 3 * dim)),
        "qkv_b": (dense(ks[5], dim, (3 * dim,)) if qkv_bias
                  else jnp.zeros((3 * dim,), dtype)),
        "proj_w": dense(ks[6], dim, (dim, dim)),
        "proj_b": 0.1 * jax.random.normal(ks[7], (dim,), dtype),
        "fc1_w": dense(ks[8], dim, (dim, hidden)),
        "fc1_b": jnp.zeros((hidden,), dtype),
        "fc2_w": dense(ks[9], hidden, (hidden, dim)),
        "fc2_b": jnp.zeros((dim,), dtype),
    }


@functools.partial(jax.jit, static_argnames=("num_heads", "drop_path_prob", "training"))
def block_forward(params, x, rng_key, *, num_heads, drop_path_prob, training):
    B, N, C = x.shape
    hd = C // num_heads
    attn_scale = hd ** -0.5

    # Per-sample stochastic-depth scales, precomputed (trivial (B,) math).
    if training and drop_path_prob > 0.0:
        keep = 1.0 - drop_path_prob
        k1, k2 = jax.random.split(rng_key)
        r1 = jax.random.uniform(k1, (B,), dtype=jnp.float32)
        r2 = jax.random.uniform(k2, (B,), dtype=jnp.float32)
        scale1 = jnp.floor(keep + r1) / keep
        scale2 = jnp.floor(keep + r2) / keep
    else:
        scale1 = jnp.ones((B,), jnp.float32)
        scale2 = jnp.ones((B,), jnp.float32)

    x2d = x.reshape(B * N, C)

    # ---- attention branch on norm1(x)
    h = layernorm(x2d, params["norm1_w"], params["norm1_b"])
    qkv = linear(h, params["qkv_w"], params["qkv_b"])                  # (B*N, 3C)
    qkv = qkv.reshape(B, N, 3, num_heads, hd).transpose(2, 0, 3, 1, 4)
    q, k, v = qkv[0], qkv[1], qkv[2]                                    # (B,H,N,hd)
    # TODO(synk): DropKey (attn_drop > 0) and attn_mask are not implemented;
    # the module defaults (attn_drop=0, attn_mask=None) make them identity.
    o = attention_core(q, k, v, scale=attn_scale)                       # (B,H,N,hd)
    o = o.transpose(0, 2, 1, 3).reshape(B * N, C)
    y = linear(o, params["proj_w"], params["proj_b"]).reshape(B, N, C)
    # TODO(synk): proj_drop / Mlp Dropout use the module default p=0.0 (identity).

    # ---- x = x + drop_path(attn_out)   (fused residual + stochastic depth)
    x = residual_drop_path(x, y, scale1)

    # ---- MLP branch on norm2(x)
    h2 = layernorm(x.reshape(B * N, C), params["norm2_w"], params["norm2_b"])
    z = linear(h2, params["fc1_w"], params["fc1_b"], activation="gelu")
    z = linear(z, params["fc2_w"], params["fc2_b"]).reshape(B, N, C)

    # ---- x = x + drop_path(mlp_out)
    x = residual_drop_path(x, z, scale2)
    return x, (scale1, scale2)


# ------------------------------ pure-JAX reference ---------------------------

def block_reference(params, x, *, num_heads, scale1, scale2, eps=1e-5):
    B, N, C = x.shape
    hd = C // num_heads
    s = hd ** -0.5

    def ln(t, w, b):
        mu = jnp.mean(t, axis=-1, keepdims=True)
        var = jnp.mean((t - mu) ** 2, axis=-1, keepdims=True)
        return (t - mu) / jnp.sqrt(var + eps) * w + b

    h = ln(x, params["norm1_w"], params["norm1_b"])
    qkv = h @ params["qkv_w"] + params["qkv_b"]
    qkv = qkv.reshape(B, N, 3, num_heads, hd).transpose(2, 0, 3, 1, 4)
    q, k, v = qkv[0], qkv[1], qkv[2]
    attn = jnp.einsum("bhqd,bhkd->bhqk", q, k) * s
    attn = jax.nn.softmax(attn, axis=-1)
    o = jnp.einsum("bhqk,bhkd->bhqd", attn, v)
    o = o.transpose(0, 2, 1, 3).reshape(B, N, C)
    y = o @ params["proj_w"] + params["proj_b"]
    x = x + scale1[:, None, None] * y
    h2 = ln(x, params["norm2_w"], params["norm2_b"])
    z = jax.nn.gelu(h2 @ params["fc1_w"] + params["fc1_b"], approximate=True)
    z = z @ params["fc2_w"] + params["fc2_b"]
    return x + scale2[:, None, None] * z


# ---------------------------------- demo -------------------------------------

if __name__ == "__main__":
    key = jax.random.PRNGKey(0)
    k_param, k_x, k_dp = jax.random.split(key, 3)

    B, N, C, H = 2, 8, 32, 4
    params = init_block_params(k_param, C, mlp_ratio=4.0, qkv_bias=False)
    x = jax.random.normal(k_x, (B, N, C), dtype=jnp.float32)

    # Training mode with stochastic depth (drop_path = 0.25).
    out, (s1, s2) = block_forward(params, x, k_dp, num_heads=H,
                                  drop_path_prob=0.25, training=True)
    out = jax.block_until_ready(out)

    with jax.default_matmul_precision("highest"):
        ref = block_reference(params, x, num_heads=H, scale1=s1, scale2=s2)

    assert out.shape == x.shape and out.dtype == x.dtype
    err = float(jnp.max(jnp.abs(out - ref)))
    assert jnp.allclose(out, ref, atol=2e-3, rtol=2e-3), f"train max|err|={err}"

    # Eval mode: drop_path is identity, residual adds still fused.
    out_eval, _ = block_forward(params, x, k_dp, num_heads=H,
                                drop_path_prob=0.25, training=False)
    out_eval = jax.block_until_ready(out_eval)
    with jax.default_matmul_precision("highest"):
        ref_eval = block_reference(params, x, num_heads=H,
                                   scale1=jnp.ones((B,), jnp.float32),
                                   scale2=jnp.ones((B,), jnp.float32))
    err_e = float(jnp.max(jnp.abs(out_eval - ref_eval)))
    assert jnp.allclose(out_eval, ref_eval, atol=2e-3, rtol=2e-3), f"eval max|err|={err_e}"

    print("KERNEL_OK")
</pallas_src>

<mosaic_0001>
module attributes {stable_mosaic.version = 11 : i64} {
  func.func @_linear_kernel(%arg0: i32, %arg1: memref<16x32xf32, #tpu.memory_space<vmem>>, %arg2: memref<32x96xf32, #tpu.memory_space<vmem>>, %arg3: memref<1x96xf32, #tpu.memory_space<vmem>>, %arg4: memref<16x96xf32, #tpu.memory_space<vmem>>) attributes {dimension_semantics = [#tpu.dimension_semantics<parallel>], iteration_bounds = array<i64: 1>, scalar_prefetch = 0 : i64, scratch_operands = 0 : i64, tpu.core_type = #tpu.core_type<tc>, window_params = [{transform_indices = @transform_0, window_bounds = array<i64: 16, 32>}, {pipeline_mode = #tpu.pipeline_mode<synchronous>, transform_indices = @transform_1, window_bounds = array<i64: 32, 96>}, {pipeline_mode = #tpu.pipeline_mode<synchronous>, transform_indices = @transform_2, window_bounds = array<i64: 1, 96>}, {transform_indices = @transform_3, window_bounds = array<i64: 16, 96>}]} {
    %c0 = arith.constant 0 : index
    %c0_0 = arith.constant 0 : index
    %0 = vector.load %arg1[%c0, %c0_0] : memref<16x32xf32, #tpu.memory_space<vmem>>, vector<16x32xf32>
    %c0_1 = arith.constant 0 : index
    %c0_2 = arith.constant 0 : index
    %1 = vector.load %arg2[%c0_1, %c0_2] : memref<32x96xf32, #tpu.memory_space<vmem>>, vector<32x96xf32>
    %cst = arith.constant dense<0.000000e+00> : vector<16x96xf32>
    %2 = tpu.matmul %0, %1, %cst {dimension_numbers = #tpu.dot_dimension_numbers<[1], [0], [0], [1], [0, 0, 1, 1], [], []>} : vector<16x32xf32>, vector<32x96xf32>, vector<16x96xf32> -> vector<16x96xf32>
    %c0_3 = arith.constant 0 : index
    %c0_4 = arith.constant 0 : index
    %3 = vector.load %arg3[%c0_3, %c0_4] : memref<1x96xf32, #tpu.memory_space<vmem>>, vector<1x96xf32>
    %4 = vector.broadcast %3 : vector<1x96xf32> to vector<16x96xf32>
    %5 = arith.addf %2, %4 : vector<16x96xf32>
    %c0_5 = arith.constant 0 : index
    %c0_6 = arith.constant 0 : index
    %6 = vector.load %arg4[%c0_5, %c0_6] : memref<16x96xf32, #tpu.memory_space<vmem>>, vector<16x96xf32>
    tpu.vector_store %arg4[%c0_5, %c0_6], %5 {strides = array<i32>} : memref<16x96xf32, #tpu.memory_space<vmem>>, vector<16x96xf32>,
    return
  }
  func.func @transform_0(%arg0: i32) -> (i32, i32) {
    %c0_i32 = arith.constant 0 : i32
    %c0_i32_0 = arith.constant 0 : i32
    return %arg0, %c0_i32 : i32, i32
  }
  func.func @transform_1(%arg0: i32) -> (i32, i32) {
    %c0_i32 = arith.constant 0 : i32
    %c0_i32_0 = arith.constant 0 : i32
    %c0_i32_1 = arith.constant 0 : i32
    return %c0_i32, %c0_i32_0 : i32, i32
  }
  func.func @transform_2(%arg0: i32) -> (i32, i32) {
    %c0_i32 = arith.constant 0 : i32
    %c0_i32_0 = arith.constant 0 : i32
    %c0_i32_1 = arith.constant 0 : i32
    return %c0_i32, %c0_i32_0 : i32, i32
  }
  func.func @transform_3(%arg0: i32) -> (i32, i32) {
    %c0_i32 = arith.constant 0 : i32
    %c0_i32_0 = arith.constant 0 : i32
    return %arg0, %c0_i32 : i32, i32
  }
}

module attributes {stable_mosaic.version = 11 : i64} {
  func.func @_layernorm_kernel(%arg0: i32, %arg1: memref<16x32xf32, #tpu.memory_space<vmem>>, %arg2: memref<1x32xf32, #tpu.memory_space<vmem>>, %arg3: memref<1x32xf32, #tpu.memory_space<vmem>>, %arg4: memref<16x32xf32, #tpu.memory_space<vmem>>) attributes {dimension_semantics = [#tpu.dimension_semantics<parallel>], iteration_bounds = array<i64: 1>, scalar_prefetch = 0 : i64, scratch_operands = 0 : i64, tpu.core_type = #tpu.core_type<tc>, window_params = [{transform_indices = @transform_0, window_bounds = array<i64: 16, 32>}, {pipeline_mode = #tpu.pipeline_mode<synchronous>, transform_indices = @transform_1, window_bounds = array<i64: 1, 32>}, {pipeline_mode = #tpu.pipeline_mode<synchronous>, transform_indices = @transform_2, window_bounds = array<i64: 1, 32>}, {transform_indices = @transform_3, window_bounds = array<i64: 16, 32>}]} {
    %c0 = arith.constant 0 : index
    %c0_0 = arith.constant 0 : index
    %0 = vector.load %arg1[%c0, %c0_0] : memref<16x32xf32, #tpu.memory_space<vmem>>, vector<16x32xf32>
    %cst = arith.constant dense<0.000000e+00> : vector<16xf32>
    %1 = vector.multi_reduction <add>, %0, %cst [1] : vector<16x32xf32> to vector<16xf32>
    %2 = vector.shape_cast %1 : vector<16xf32> to vector<16x1xf32>
    %cst_1 = arith.constant 3.200000e+01 : f32
    %3 = vector.broadcast %cst_1 : f32 to vector<16x1xf32>
    %4 = arith.divf %2, %3 : vector<16x1xf32>
    %5 = vector.broadcast %4 : vector<16x1xf32> to vector<16x32xf32>
    %6 = arith.subf %0, %5 : vector<16x32xf32>
    %7 = arith.mulf %6, %6 : vector<16x32xf32>
    %cst_2 = arith.constant dense<0.000000e+00> : vector<16xf32>
    %8 = vector.multi_reduction <add>, %7, %cst_2 [1] : vector<16x32xf32> to vector<16xf32>
    %9 = vector.shape_cast %8 : vector<16xf32> to vector<16x1xf32>
    %cst_3 = arith.constant 3.200000e+01 : f32
    %10 = vector.broadcast %cst_3 : f32 to vector<16x1xf32>
    %11 = arith.divf %9, %10 : vector<16x1xf32>
    %cst_4 = arith.constant 9.99999974E-6 : f32
    %12 = vector.broadcast %cst_4 : f32 to vector<16x1xf32>
    %13 = arith.addf %11, %12 : vector<16x1xf32>
    %14 = math.rsqrt %13 : vector<16x1xf32>
    %15 = vector.broadcast %14 : vector<16x1xf32> to vector<16x32xf32>
    %16 = arith.mulf %6, %15 : vector<16x32xf32>
    %c0_5 = arith.constant 0 : index
    %c0_6 = arith.constant 0 : index
    %17 = vector.load %arg2[%c0_5, %c0_6] : memref<1x32xf32, #tpu.memory_space<vmem>>, vector<1x32xf32>
    %18 = vector.broadcast %17 : vector<1x32xf32> to vector<16x32xf32>
    %19 = arith.mulf %16, %18 : vector<16x32xf32>
    %c0_7 = arith.constant 0 : index
    %c0_8 = arith.constant 0 : index
    %20 = vector.load %arg3[%c0_7, %c0_8] : memref<1x32xf32, #tpu.memory_space<vmem>>, vector<1x32xf32>
    %21 = vector.broadcast %20 : vector<1x32xf32> to vector<16x32xf32>
    %22 = arith.addf %19, %21 : vector<16x32xf32>
    %c0_9 = arith.constant 0 : index
    %c0_10 = arith.constant 0 : index
    %23 = vector.load %arg4[%c0_9, %c0_10] : memref<16x32xf32, #tpu.memory_space<vmem>>, vector<16x32xf32>
    tpu.vector_store %arg4[%c0_9, %c0_10], %22 {strides = array<i32>} : memref<16x32xf32, #tpu.memory_space<vmem>>, vector<16x32xf32>,
    return
  }
  func.func @transform_0(%arg0: i32) -> (i32, i32) {
    %c0_i32 = arith.constant 0 : i32
    %c0_i32_0 = arith.constant 0 : i32
    return %arg0, %c0_i32 : i32, i32
  }
  func.func @transform_1(%arg0: i32) -> (i32, i32) {
    %c0_i32 = arith.constant 0 : i32
    %c0_i32_0 = arith.constant 0 : i32
    %c0_i32_1 = arith.constant 0 : i32
    return %c0_i32, %c0_i32_0 : i32, i32
  }
  func.func @transform_2(%arg0: i32) -> (i32, i32) {
    %c0_i32 = arith.constant 0 : i32
    %c0_i32_0 = arith.constant 0 : i32
    %c0_i32_1 = arith.constant 0 : i32
    return %c0_i32, %c0_i32_0 : i32, i32
  }
  func.func @transform_3(%arg0: i32) -> (i32, i32) {
    %c0_i32 = arith.constant 0 : i32
    %c0_i32_0 = arith.constant 0 : i32
    return %arg0, %c0_i32 : i32, i32
  }
}

module attributes {stable_mosaic.version = 11 : i64} {
  func.func @_attention_kernel(%arg0: i32, %arg1: i32, %arg2: memref<1x1x8x8xf32, #tpu.memory_space<vmem>>, %arg3: memref<1x1x8x8xf32, #tpu.memory_space<vmem>>, %arg4: memref<1x1x8x8xf32, #tpu.memory_space<vmem>>, %arg5: memref<1x1x8x8xf32, #tpu.memory_space<vmem>>) attributes {dimension_semantics = [#tpu.dimension_semantics<parallel>, #tpu.dimension_semantics<parallel>], iteration_bounds = array<i64: 2, 4>, scalar_prefetch = 0 : i64, scratch_operands = 0 : i64, tpu.core_type = #tpu.core_type<tc>, window_params = [{transform_indices = @transform_0, window_bounds = array<i64: 1, 1, 8, 8>}, {transform_indices = @transform_1, window_bounds = array<i64: 1, 1, 8, 8>}, {transform_indices = @transform_2, window_bounds = array<i64: 1, 1, 8, 8>}, {transform_indices = @transform_3, window_bounds = array<i64: 1, 1, 8, 8>}]} {
    %c0 = arith.constant 0 : index
    %c0_0 = arith.constant 0 : index
    %c0_1 = arith.constant 0 : index
    %c0_2 = arith.constant 0 : index
    %0 = vector.load %arg2[%c0, %c0_0, %c0_1, %c0_2] : memref<1x1x8x8xf32, #tpu.memory_space<vmem>>, vector<1x1x8x8xf32>
    %1 = vector.shape_cast %0 : vector<1x1x8x8xf32> to vector<8x8xf32>
    %c0_3 = arith.constant 0 : index
    %c0_4 = arith.constant 0 : index
    %c0_5 = arith.constant 0 : index
    %c0_6 = arith.constant 0 : index
    %2 = vector.load %arg3[%c0_3, %c0_4, %c0_5, %c0_6] : memref<1x1x8x8xf32, #tpu.memory_space<vmem>>, vector<1x1x8x8xf32>
    %3 = vector.shape_cast %2 : vector<1x1x8x8xf32> to vector<8x8xf32>
    %cst = arith.constant dense<0.000000e+00> : vector<8x8xf32>
    %4 = tpu.matmul %1, %3, %cst {dimension_numbers = #tpu.dot_dimension_numbers<[1], [1], [0], [0], [0, 0, 1, 0], [], []>} : vector<8x8xf32>, vector<8x8xf32>, vector<8x8xf32> -> vector<8x8xf32>
    %cst_7 = arith.constant 0.353553385 : f32
    %5 = vector.broadcast %cst_7 : f32 to vector<8x8xf32>
    %6 = arith.mulf %4, %5 : vector<8x8xf32>
    %cst_8 = arith.constant dense<0xFF800000> : vector<8xf32>
    %7 = vector.multi_reduction <maximumf>, %6, %cst_8 [1] : vector<8x8xf32> to vector<8xf32>
    %8 = vector.shape_cast %7 : vector<8xf32> to vector<8x1xf32>
    %9 = vector.broadcast %8 : vector<8x1xf32> to vector<8x8xf32>
    %10 = arith.subf %6, %9 : vector<8x8xf32>
    %11 = math.exp %10 : vector<8x8xf32>
    %cst_9 = arith.constant dense<0.000000e+00> : vector<8xf32>
    %12 = vector.multi_reduction <add>, %11, %cst_9 [1] : vector<8x8xf32> to vector<8xf32>
    %13 = vector.shape_cast %12 : vector<8xf32> to vector<8x1xf32>
    %14 = vector.broadcast %13 : vector<8x1xf32> to vector<8x8xf32>
    %15 = arith.divf %11, %14 : vector<8x8xf32>
    %c0_10 = arith.constant 0 : index
    %c0_11 = arith.constant 0 : index
    %c0_12 = arith.constant 0 : index
    %c0_13 = arith.constant 0 : index
    %16 = vector.load %arg4[%c0_10, %c0_11, %c0_12, %c0_13] : memref<1x1x8x8xf32, #tpu.memory_space<vmem>>, vector<1x1x8x8xf32>
    %17 = vector.shape_cast %16 : vector<1x1x8x8xf32> to vector<8x8xf32>
    %cst_14 = arith.constant dense<0.000000e+00> : vector<8x8xf32>
    %18 = tpu.matmul %15, %17, %cst_14 {dimension_numbers = #tpu.dot_dimension_numbers<[1], [0], [0], [1], [0, 0, 1, 1], [], []>} : vector<8x8xf32>, vector<8x8xf32>, vector<8x8xf32> -> vector<8x8xf32>
    %c0_15 = arith.constant 0 : index
    %c0_16 = arith.constant 0 : index
    %c0_17 = arith.constant 0 : index
    %c0_18 = arith.constant 0 : index
    %19 = vector.load %arg5[%c0_15, %c0_16, %c0_17, %c0_18] : memref<1x1x8x8xf32, #tpu.memory_space<vmem>>, vector<1x1x8x8xf32>
    %20 = vector.shape_cast %19 : vector<1x1x8x8xf32> to vector<8x8xf32>
    %21 = vector.shape_cast %18 : vector<8x8xf32> to vector<1x1x8x8xf32>
    tpu.vector_store %arg5[%c0_15, %c0_16, %c0_17, %c0_18], %21 {strides = array<i32>} : memref<1x1x8x8xf32, #tpu.memory_space<vmem>>, vector<1x1x8x8xf32>,
    return
  }
  func.func @transform_0(%arg0: i32, %arg1: i32) -> (i32, i32, i32, i32) {
    %c0_i32 = arith.constant 0 : i32
    %c0_i32_0 = arith.constant 0 : i32
    %c0_i32_1 = arith.constant 0 : i32
    return %arg0, %arg1, %c0_i32, %c0_i32_0 : i32, i32, i32, i32
  }
  func.func @transform_1(%arg0: i32, %arg1: i32) -> (i32, i32, i32, i32) {
    %c0_i32 = arith.constant 0 : i32
    %c0_i32_0 = arith.constant 0 : i32
    %c0_i32_1 = arith.constant 0 : i32
    return %arg0, %arg1, %c0_i32, %c0_i32_0 : i32, i32, i32, i32
  }
  func.func @transform_2(%arg0: i32, %arg1: i32) -> (i32, i32, i32, i32) {
    %c0_i32 = arith.constant 0 : i32
    %c0_i32_0 = arith.constant 0 : i32
    %c0_i32_1 = arith.constant 0 : i32
    return %arg0, %arg1, %c0_i32, %c0_i32_0 : i32, i32, i32, i32
  }
  func.func @transform_3(%arg0: i32, %arg1: i32) -> (i32, i32, i32, i32) {
    %c0_i32 = arith.constant 0 : i32
    %c0_i32_0 = arith.constant 0 : i32
    %c0_i32_1 = arith.constant 0 : i32
    return %arg0, %arg1, %c0_i32, %c0_i32_0 : i32, i32, i32, i32
  }
}

module attributes {stable_mosaic.version = 11 : i64} {
  func.func @_linear_kernel(%arg0: i32, %arg1: memref<16x32xf32, #tpu.memory_space<vmem>>, %arg2: memref<32x32xf32, #tpu.memory_space<vmem>>, %arg3: memref<1x32xf32, #tpu.memory_space<vmem>>, %arg4: memref<16x32xf32, #tpu.memory_space<vmem>>) attributes {dimension_semantics = [#tpu.dimension_semantics<parallel>], iteration_bounds = array<i64: 1>, scalar_prefetch = 0 : i64, scratch_operands = 0 : i64, tpu.core_type = #tpu.core_type<tc>, window_params = [{transform_indices = @transform_0, window_bounds = array<i64: 16, 32>}, {pipeline_mode = #tpu.pipeline_mode<synchronous>, transform_indices = @transform_1, window_bounds = array<i64: 32, 32>}, {pipeline_mode = #tpu.pipeline_mode<synchronous>, transform_indices = @transform_2, window_bounds = array<i64: 1, 32>}, {transform_indices = @transform_3, window_bounds = array<i64: 16, 32>}]} {
    %c0 = arith.constant 0 : index
    %c0_0 = arith.constant 0 : index
    %0 = vector.load %arg1[%c0, %c0_0] : memref<16x32xf32, #tpu.memory_space<vmem>>, vector<16x32xf32>
    %c0_1 = arith.constant 0 : index
    %c0_2 = arith.constant 0 : index
    %1 = vector.load %arg2[%c0_1, %c0_2] : memref<32x32xf32, #tpu.memory_space<vmem>>, vector<32x32xf32>
    %cst = arith.constant dense<0.000000e+00> : vector<16x32xf32>
    %2 = tpu.matmul %0, %1, %cst {dimension_numbers = #tpu.dot_dimension_numbers<[1], [0], [0], [1], [0, 0, 1, 1], [], []>} : vector<16x32xf32>, vector<32x32xf32>, vector<16x32xf32> -> vector<16x32xf32>
    %c0_3 = arith.constant 0 : index
    %c0_4 = arith.constant 0 : index
    %3 = vector.load %arg3[%c0_3, %c0_4] : memref<1x32xf32, #tpu.memory_space<vmem>>, vector<1x32xf32>
    %4 = vector.broadcast %3 : vector<1x32xf32> to vector<16x32xf32>
    %5 = arith.addf %2, %4 : vector<16x32xf32>
    %c0_5 = arith.constant 0 : index
    %c0_6 = arith.constant 0 : index
    %6 = vector.load %arg4[%c0_5, %c0_6] : memref<16x32xf32, #tpu.memory_space<vmem>>, vector<16x32xf32>
    tpu.vector_store %arg4[%c0_5, %c0_6], %5 {strides = array<i32>} : memref<16x32xf32, #tpu.memory_space<vmem>>, vector<16x32xf32>,
    return
  }
  func.func @transform_0(%arg0: i32) -> (i32, i32) {
    %c0_i32 = arith.constant 0 : i32
    %c0_i32_0 = arith.constant 0 : i32
    return %arg0, %c0_i32 : i32, i32
  }
  func.func @transform_1(%arg0: i32) -> (i32, i32) {
    %c0_i32 = arith.constant 0 : i32
    %c0_i32_0 = arith.constant 0 : i32
    %c0_i32_1 = arith.constant 0 : i32
    return %c0_i32, %c0_i32_0 : i32, i32
  }
  func.func @transform_2(%arg0: i32) -> (i32, i32) {
    %c0_i32 = arith.constant 0 : i32
    %c0_i32_0 = arith.constant 0 : i32
    %c0_i32_1 = arith.constant 0 : i32
    return %c0_i32, %c0_i32_0 : i32, i32
  }
  func.func @transform_3(%arg0: i32) -> (i32, i32) {
    %c0_i32 = arith.constant 0 : i32
    %c0_i32_0 = arith.constant 0 : i32
    return %arg0, %c0_i32 : i32, i32
  }
}

module attributes {stable_mosaic.version = 11 : i64} {
  func.func @_residual_drop_path_kernel(%arg0: i32, %arg1: memref<2x256xf32, #tpu.memory_space<vmem>>, %arg2: memref<2x256xf32, #tpu.memory_space<vmem>>, %arg3: memref<2x1xf32, #tpu.memory_space<vmem>>, %arg4: memref<2x256xf32, #tpu.memory_space<vmem>>) attributes {dimension_semantics = [#tpu.dimension_semantics<parallel>], iteration_bounds = array<i64: 1>, scalar_prefetch = 0 : i64, scratch_operands = 0 : i64, tpu.core_type = #tpu.core_type<tc>, window_params = [{transform_indices = @transform_0, window_bounds = array<i64: 2, 256>}, {transform_indices = @transform_1, window_bounds = array<i64: 2, 256>}, {transform_indices = @transform_2, window_bounds = array<i64: 2, 1>}, {transform_indices = @transform_3, window_bounds = array<i64: 2, 256>}]} {
    %c0 = arith.constant 0 : index
    %c0_0 = arith.constant 0 : index
    %0 = vector.load %arg3[%c0, %c0_0] : memref<2x1xf32, #tpu.memory_space<vmem>>, vector<2x1xf32>
    %c0_1 = arith.constant 0 : index
    %c0_2 = arith.constant 0 : index
    %1 = vector.load %arg1[%c0_1, %c0_2] : memref<2x256xf32, #tpu.memory_space<vmem>>, vector<2x256xf32>
    %c0_3 = arith.constant 0 : index
    %c0_4 = arith.constant 0 : index
    %2 = vector.load %arg2[%c0_3, %c0_4] : memref<2x256xf32, #tpu.memory_space<vmem>>, vector<2x256xf32>
    %3 = vector.broadcast %0 : vector<2x1xf32> to vector<2x256xf32>
    %4 = arith.mulf %2, %3 : vector<2x256xf32>
    %5 = arith.addf %1, %4 : vector<2x256xf32>
    %c0_5 = arith.constant 0 : index
    %c0_6 = arith.constant 0 : index
    %6 = vector.load %arg4[%c0_5, %c0_6] : memref<2x256xf32, #tpu.memory_space<vmem>>, vector<2x256xf32>
    tpu.vector_store %arg4[%c0_5, %c0_6], %5 {strides = array<i32>} : memref<2x256xf32, #tpu.memory_space<vmem>>, vector<2x256xf32>,
    return
  }
  func.func @transform_0(%arg0: i32) -> (i32, i32) {
    %c0_i32 = arith.constant 0 : i32
    %c0_i32_0 = arith.constant 0 : i32
    return %arg0, %c0_i32 : i32, i32
  }
  func.func @transform_1(%arg0: i32) -> (i32, i32) {
    %c0_i32 = arith.constant 0 : i32
    %c0_i32_0 = arith.constant 0 : i32
    return %arg0, %c0_i32 : i32, i32
  }
  func.func @transform_2(%arg0: i32) -> (i32, i32) {
    %c0_i32 = arith.constant 0 : i32
    %c0_i32_0 = arith.constant 0 : i32
    return %arg0, %c0_i32 : i32, i32
  }
  func.func @transform_3(%arg0: i32) -> (i32, i32) {
    %c0_i32 = arith.constant 0 : i32
    %c0_i32_0 = arith.constant 0 : i32
    return %arg0, %c0_i32 : i32, i32
  }
}

module attributes {stable_mosaic.version = 11 : i64} {
  func.func @_linear_kernel(%arg0: i32, %arg1: memref<16x32xf32, #tpu.memory_space<vmem>>, %arg2: memref<32x128xf32, #tpu.memory_space<vmem>>, %arg3: memref<1x128xf32, #tpu.memory_space<vmem>>, %arg4: memref<16x128xf32, #tpu.memory_space<vmem>>) attributes {dimension_semantics = [#tpu.dimension_semantics<parallel>], iteration_bounds = array<i64: 1>, scalar_prefetch = 0 : i64, scratch_operands = 0 : i64, tpu.core_type = #tpu.core_type<tc>, window_params = [{transform_indices = @transform_0, window_bounds = array<i64: 16, 32>}, {pipeline_mode = #tpu.pipeline_mode<synchronous>, transform_indices = @transform_1, window_bounds = array<i64: 32, 128>}, {pipeline_mode = #tpu.pipeline_mode<synchronous>, transform_indices = @transform_2, window_bounds = array<i64: 1, 128>}, {transform_indices = @transform_3, window_bounds = array<i64: 16, 128>}]} {
    %c0 = arith.constant 0 : index
    %c0_0 = arith.constant 0 : index
    %0 = vector.load %arg1[%c0, %c0_0] : memref<16x32xf32, #tpu.memory_space<vmem>>, vector<16x32xf32>
    %c0_1 = arith.constant 0 : index
    %c0_2 = arith.constant 0 : index
    %1 = vector.load %arg2[%c0_1, %c0_2] : memref<32x128xf32, #tpu.memory_space<vmem>>, vector<32x128xf32>
    %cst = arith.constant dense<0.000000e+00> : vector<16x128xf32>
    %2 = tpu.matmul %0, %1, %cst {dimension_numbers = #tpu.dot_dimension_numbers<[1], [0], [0], [1], [0, 0, 1, 1], [], []>} : vector<16x32xf32>, vector<32x128xf32>, vector<16x128xf32> -> vector<16x128xf32>
    %c0_3 = arith.constant 0 : index
    %c0_4 = arith.constant 0 : index
    %3 = vector.load %arg3[%c0_3, %c0_4] : memref<1x128xf32, #tpu.memory_space<vmem>>, vector<1x128xf32>
    %4 = vector.broadcast %3 : vector<1x128xf32> to vector<16x128xf32>
    %5 = arith.addf %2, %4 : vector<16x128xf32>
    %6 = arith.mulf %5, %5 : vector<16x128xf32>
    %7 = arith.mulf %5, %6 : vector<16x128xf32>
    %cst_5 = arith.constant 4.471500e-02 : f32
    %8 = vector.broadcast %cst_5 : f32 to vector<16x128xf32>
    %9 = arith.mulf %8, %7 : vector<16x128xf32>
    %10 = arith.addf %5, %9 : vector<16x128xf32>
    %cst_6 = arith.constant 0.797884583 : f32
    %11 = vector.broadcast %cst_6 : f32 to vector<16x128xf32>
    %12 = arith.mulf %11, %10 : vector<16x128xf32>
    %13 = math.tanh %12 : vector<16x128xf32>
    %cst_7 = arith.constant 1.000000e+00 : f32
    %14 = vector.broadcast %cst_7 : f32 to vector<16x128xf32>
    %15 = arith.addf %14, %13 : vector<16x128xf32>
    %cst_8 = arith.constant 5.000000e-01 : f32
    %16 = vector.broadcast %cst_8 : f32 to vector<16x128xf32>
    %17 = arith.mulf %16, %15 : vector<16x128xf32>
    %18 = arith.mulf %5, %17 : vector<16x128xf32>
    %c0_9 = arith.constant 0 : index
    %c0_10 = arith.constant 0 : index
    %19 = vector.load %arg4[%c0_9, %c0_10] : memref<16x128xf32, #tpu.memory_space<vmem>>, vector<16x128xf32>
    tpu.vector_store %arg4[%c0_9, %c0_10], %18 {strides = array<i32>} : memref<16x128xf32, #tpu.memory_space<vmem>>, vector<16x128xf32>,
    return
  }
  func.func @transform_0(%arg0: i32) -> (i32, i32) {
    %c0_i32 = arith.constant 0 : i32
    %c0_i32_0 = arith.constant 0 : i32
    return %arg0, %c0_i32 : i32, i32
  }
  func.func @transform_1(%arg0: i32) -> (i32, i32) {
    %c0_i32 = arith.constant 0 : i32
    %c0_i32_0 = arith.constant 0 : i32
    %c0_i32_1 = arith.constant 0 : i32
    return %c0_i32, %c0_i32_0 : i32, i32
  }
  func.func @transform_2(%arg0: i32) -> (i32, i32) {
    %c0_i32 = arith.constant 0 : i32
    %c0_i32_0 = arith.constant 0 : i32
    %c0_i32_1 = arith.constant 0 : i32
    return %c0_i32, %c0_i32_0 : i32, i32
  }
  func.func @transform_3(%arg0: i32) -> (i32, i32) {
    %c0_i32 = arith.constant 0 : i32
    %c0_i32_0 = arith.constant 0 : i32
    return %arg0, %c0_i32 : i32, i32
  }
}

module attributes {stable_mosaic.version = 11 : i64} {
  func.func @_linear_kernel(%arg0: i32, %arg1: memref<16x128xf32, #tpu.memory_space<vmem>>, %arg2: memref<128x32xf32, #tpu.memory_space<vmem>>, %arg3: memref<1x32xf32, #tpu.memory_space<vmem>>, %arg4: memref<16x32xf32, #tpu.memory_space<vmem>>) attributes {dimension_semantics = [#tpu.dimension_semantics<parallel>], iteration_bounds = array<i64: 1>, scalar_prefetch = 0 : i64, scratch_operands = 0 : i64, tpu.core_type = #tpu.core_type<tc>, window_params = [{transform_indices = @transform_0, window_bounds = array<i64: 16, 128>}, {pipeline_mode = #tpu.pipeline_mode<synchronous>, transform_indices = @transform_1, window_bounds = array<i64: 128, 32>}, {pipeline_mode = #tpu.pipeline_mode<synchronous>, transform_indices = @transform_2, window_bounds = array<i64: 1, 32>}, {transform_indices = @transform_3, window_bounds = array<i64: 16, 32>}]} {
    %c0 = arith.constant 0 : index
    %c0_0 = arith.constant 0 : index
    %0 = vector.load %arg1[%c0, %c0_0] : memref<16x128xf32, #tpu.memory_space<vmem>>, vector<16x128xf32>
    %c0_1 = arith.constant 0 : index
    %c0_2 = arith.constant 0 : index
    %1 = vector.load %arg2[%c0_1, %c0_2] : memref<128x32xf32, #tpu.memory_space<vmem>>, vector<128x32xf32>
    %cst = arith.constant dense<0.000000e+00> : vector<16x32xf32>
    %2 = tpu.matmul %0, %1, %cst {dimension_numbers = #tpu.dot_dimension_numbers<[1], [0], [0], [1], [0, 0, 1, 1], [], []>} : vector<16x128xf32>, vector<128x32xf32>, vector<16x32xf32> -> vector<16x32xf32>
    %c0_3 = arith.constant 0 : index
    %c0_4 = arith.constant 0 : index
    %3 = vector.load %arg3[%c0_3, %c0_4] : memref<1x32xf32, #tpu.memory_space<vmem>>, vector<1x32xf32>
    %4 = vector.broadcast %3 : vector<1x32xf32> to vector<16x32xf32>
    %5 = arith.addf %2, %4 : vector<16x32xf32>
    %c0_5 = arith.constant 0 : index
    %c0_6 = arith.constant 0 : index
    %6 = vector.load %arg4[%c0_5, %c0_6] : memref<16x32xf32, #tpu.memory_space<vmem>>, vector<16x32xf32>
    tpu.vector_store %arg4[%c0_5, %c0_6], %5 {strides = array<i32>} : memref<16x32xf32, #tpu.memory_space<vmem>>, vector<16x32xf32>,
    return
  }
  func.func @transform_0(%arg0: i32) -> (i32, i32) {
    %c0_i32 = arith.constant 0 : i32
    %c0_i32_0 = arith.constant 0 : i32
    return %arg0, %c0_i32 : i32, i32
  }
  func.func @transform_1(%arg0: i32) -> (i32, i32) {
    %c0_i32 = arith.constant 0 : i32
    %c0_i32_0 = arith.constant 0 : i32
    %c0_i32_1 = arith.constant 0 : i32
    return %c0_i32, %c0_i32_0 : i32, i32
  }
  func.func @transform_2(%arg0: i32) -> (i32, i32) {
    %c0_i32 = arith.constant 0 : i32
    %c0_i32_0 = arith.constant 0 : i32
    %c0_i32_1 = arith.constant 0 : i32
    return %c0_i32, %c0_i32_0 : i32, i32
  }
  func.func @transform_3(%arg0: i32) -> (i32, i32) {
    %c0_i32 = arith.constant 0 : i32
    %c0_i32_0 = arith.constant 0 : i32
    return %arg0, %c0_i32 : i32, i32
  }
}

</mosaic_0001>

<llo_original>
// kernel: block_forward.24
$region0: #{block_forward.24}
  #allocation0 [shape = 'u32[]', space=smem, size = 0x4, offset = 0x4, fixed_abs, tag = 'smem constant byte address 0x4 - core index']
  #allocation1 [shape = 'u32[144,128]{1,0:T(1,128)}', space=vmem, size = 0x12000, scoped, tag = 'internal scratch']
  %s0 = inlined_call_operand.vmem [shape: f32[16,32], index: 0, kind: input, shape index: {}]
  %s1 = inlined_call_operand.vmem [shape: f32[32,96], index: 1, kind: input, shape index: {}]
  %s2 = inlined_call_operand.vmem [shape: f32[1,96], index: 2, kind: input, shape index: {}]
  %s3 = inlined_call_operand.vmem [shape: f32[16,96], index: 3, kind: output, shape index: {}]
  %s4 = sld [smem:[#allocation0]]
  $region22: #{block_forward.24} parent=0
    _
  %s6 = ssub.s32 1, %s4
  %s7 = scalar_select 0, %s6, %s4
  // Predicated region
  $region2: #{block_forward.24} parent=0 // pred_check
    _
  $region3: #{block_forward.24} parent=0 // pred_check_branch
    %9 = sbr.rel (0) target = $region5
  $region4: #{block_forward.24} parent=0 // pred_region
    _
  $region5: #{block_forward.24} parent=0 // pred_fallthru
    _
  // Predicated region
  $region6: #{block_forward.24} parent=0 // pred_check
    _
  $region7: #{block_forward.24} parent=0 // pred_check_branch
    %11 = sbr.rel (0) target = $region9
  $region8: #{block_forward.24} parent=0 // pred_region
    _
  $region9: #{block_forward.24} parent=0 // pred_fallthru
    _
  // Predicated region
  $region10: #{block_forward.24} parent=0 // pred_check
    _
  $region11: #{block_forward.24} parent=0 // pred_check_branch
    %13 = sbr.rel (0) target = $region13
  $region12: #{block_forward.24} parent=0 // pred_region
    _
  $region13: #{block_forward.24} parent=0 // pred_fallthru
    _
  %v14 = vld [vmem:[%s0] sm:$0xff]
  %v15 = vld [vmem:[%s0 + $0x8] sm:$0xff]
  %v16 = vld [vmem:[%s1] sm:$0xff]
  %v17 = vld [vmem:[%s1 + $0x8] sm:$0xff]
  %v18 = vld [vmem:[%s1 + $0x10] sm:$0xff]
  %v19 = vld [vmem:[%s1 + $0x18] sm:$0xff]
  %v20 = vld [vmem:[%s2] sm:$0x1]
  %v22 = vlaneseq
  %v23 = vshrl.u32 %v22, 7
  %v24 = vsub.s32 0, %v23
  %v25 = vrot.slane %v20, %v24
  %vm27 = vcmask 261120
  %v29 = vsel %vm27, %v14, 0
  %v32 = vsel %vm27, %v15, 0
  %34 = vmatprep.subr.mxu0 0.0
  %35 = vmatpush1.msra.mxu0 0.0
  %36 = vmatprep.subr.mxu0 0.0
  %37 = vmatpush1.msra.mxu0 0.0
  %38 = vmatprep.subr.mxu0 0.0
  %39 = vmatpush1.msra.mxu0 0.0
  %40 = vmatprep.subr.mxu0 0.0
  %41 = vmatpush1.msra.mxu0 0.0
  %42 = vmatprep.subr.mxu0 0.0
  %43 = vmatpush1.msra.mxu0 0.0
  %44 = vmatprep.subr.mxu0 0.0
  %45 = vmatpush1.msra.mxu0 0.0
  %46 = vmatprep.subr.mxu0 0.0
  %47 = vmatpush1.msra.mxu0 0.0
  %48 = vmatprep.subr.mxu0 0.0
  %49 = vmatpush1.msra.mxu0 0.0
  %50 = vmatprep.subr.mxu0 0.0
  %51 = vmatpush1.msra.mxu0 0.0
  %52 = vmatprep.subr.mxu0 0.0
  %53 = vmatpush1.msra.mxu0 0.0
  %54 = vmatprep.subr.mxu0 0.0
  %55 = vmatpush1.msra.mxu0 0.0
  %56 = vmatprep.subr.mxu0 0.0
  %57 = vmatpush1.msra.mxu0 0.0
  %58 = vmatprep.subr.mxu0 0.0
  %59 = vmatpush1.msra.mxu0 %v19
  %60 = vmatprep.subr.mxu0 0.0
  %61 = vmatpush1.msra.mxu0 %v18
  %62 = vmatprep.subr.mxu0 0.0
  %63 = vmatpush1.msra.mxu0 %v17
  %64 = vmatprep.subr.mxu0 0.0
  %65 = vmatpush1.msra.mxu0 %v16
  %66 = vmatprep.subr.mxu0 0.0
  %67 = vmatpush2.msra.mxu0 0.0
  %68 = vmatprep.subr.mxu0 0.0
  %69 = vmatpush2.msra.mxu0 0.0
  %70 = vmatprep.subr.mxu0 0.0
  %71 = vmatpush2.msra.mxu0 0.0
  %72 = vmatprep.subr.mxu0 0.0
  %73 = vmatpush2.msra.mxu0 0.0
  %74 = vmatprep.subr.mxu0 0.0
  %75 = vmatpush2.msra.mxu0 0.0
  %76 = vmatprep.subr.mxu0 0.0
  %77 = vmatpush2.msra.mxu0 0.0
  %78 = vmatprep.subr.mxu0 0.0
  %79 = vmatpush2.msra.mxu0 0.0
  %80 = vmatprep.subr.mxu0 0.0
  %81 = vmatpush2.msra.mxu0 0.0
  %82 = vmatprep.subr.mxu0 0.0
  %83 = vmatpush2.msra.mxu0 0.0
  %84 = vmatprep.subr.mxu0 0.0
  %85 = vmatpush2.msra.mxu0 0.0
  %86 = vmatprep.subr.mxu0 0.0
  %87 = vmatpush2.msra.mxu0 0.0
  %88 = vmatprep.subr.mxu0 0.0
  %89 = vmatpush2.msra.mxu0 0.0
  %90 = vmatprep.subr.mxu0 0.0
  %91 = vmatpush2.msra.mxu0 0.0
  %92 = vmatprep.subr.mxu0 0.0
  %93 = vmatpush2.msra.mxu0 0.0
  %94 = vmatprep.subr.mxu0 0.0
  %95 = vmatpush2.msra.mxu0 0.0
  %96 = vmatprep.subr.mxu0 0.0
  %97 = vmatpush2.msra.mxu0 0.0
  %98 = vmatprep.mubr.f32.mxu0 0.0
  %99 = vmatmul.mubr.f32.gmra.mxu0 %v29
  %v100 = vpop.f32.mrf.mxu0
  %v101 = vadd.f32 %v25, %v100
  %v102 = vpop.f32.mrf.mxu0
  %103 = vmatprep.mubr.f32.mxu0 0.0
  %104 = vmatmul.mubr.f32.gmra.mxu0 %v32
  %v105 = vpop.f32.mrf.mxu0
  %v106 = vadd.f32 %v25, %v105
  %v107 = vpop.f32.mrf.mxu0
  %108 = vdwg.mxu0
  %vm109 = vcmask 785408
  %110 = vst.msk [vmem:[%s3] sm:$0xff] %vm109, %v101
  %111 = vst.msk [vmem:[%s3 + $0x8] sm:$0xff] %vm109, %v106
  // Predicated region
  $region14: #{block_forward.24} parent=0 // pred_check
    _
  $region15: #{block_forward.24} parent=0 // pred_check_branch
    %113 = sbr.rel (0) target = $region17
  $region16: #{block_forward.24} parent=0 // pred_region
    _
  $region17: #{block_forward.24} parent=0 // pred_fallthru
    _
  // Predicated region
  $region18: #{block_forward.24} parent=0 // pred_check
    _
  $region19: #{block_forward.24} parent=0 // pred_check_branch
    %115 = sbr.rel (0) target = $region21
  $region20: #{block_forward.24} parent=0 // pred_region
    _
  $region21: #{block_forward.24} parent=0 // pred_fallthru
    _

// kernel: block_forward.23
$region0: #{block_forward.23}
  #allocation0 [shape = 'u32[]', space=smem, size = 0x4, offset = 0x4, fixed_abs, tag = 'smem constant byte address 0x4 - core index']
  #allocation1 [shape = 'u32[144,128]{1,0:T(1,128)}', space=vmem, size = 0x12000, scoped, tag = 'internal scratch']
  %s0 = inlined_call_operand.vmem [shape: f32[16,32], index: 0, kind: input, shape index: {}]
  %s1 = inlined_call_operand.vmem [shape: f32[1,32], index: 1, kind: input, shape index: {}]
  %s2 = inlined_call_operand.vmem [shape: f32[1,32], index: 2, kind: input, shape index: {}]
  %s3 = inlined_call_operand.vmem [shape: f32[16,32], index: 3, kind: output, shape index: {}]
  %s4 = sld [smem:[#allocation0]]
  $region22: #{block_forward.23} parent=0
    _
  %s6 = ssub.s32 1, %s4
  %s7 = scalar_select 0, %s6, %s4
  // Predicated region
  $region2: #{block_forward.23} parent=0 // pred_check
    _
  $region3: #{block_forward.23} parent=0 // pred_check_branch
    %9 = sbr.rel (0) target = $region5
  $region4: #{block_forward.23} parent=0 // pred_region
    _
  $region5: #{block_forward.23} parent=0 // pred_fallthru
    _
  // Predicated region
  $region6: #{block_forward.23} parent=0 // pred_check
    _
  $region7: #{block_forward.23} parent=0 // pred_check_branch
    %11 = sbr.rel (0) target = $region9
  $region8: #{block_forward.23} parent=0 // pred_region
    _
  $region9: #{block_forward.23} parent=0 // pred_fallthru
    _
  // Predicated region
  $region10: #{block_forward.23} parent=0 // pred_check
    _
  $region11: #{block_forward.23} parent=0 // pred_check_branch
    %13 = sbr.rel (0) target = $region13
  $region12: #{block_forward.23} parent=0 // pred_region
    _
  $region13: #{block_forward.23} parent=0 // pred_fallthru
    _
  %v14 = vld [vmem:[%s0] sm:$0xff]
  %v15 = vld [vmem:[%s0 + $0x8] sm:$0xff]
  %vm16 = vcmask 261120
  %v17 = vsel %vm16, %v14, 0.0
  %18 = vadd.xlane.f32.xlu0 %v17
  %v19 = vpop.xlane.xlu0 %18
  %v20 = vsel %vm16, %v15, 0.0
  %21 = vadd.xlane.f32.xlu0 %v20
  %v22 = vpop.xlane.xlu0 %21
  %v23 = vrcp.pop 32.0
  %v24 = vmul.f32 %v19, %v23
  %v25 = vmul.f32 %v22, %v23
  %v26 = vsub.f32 %v14, %v24
  %v27 = vsub.f32 %v15, %v25
  %v28 = vmul.f32 %v26, %v26
  %v29 = vmul.f32 %v27, %v27
  %v30 = vsel %vm16, %v28, 0.0
  %31 = vadd.xlane.f32.xlu0 %v30
  %v32 = vpop.xlane.xlu0 %31
  %v33 = vsel %vm16, %v29, 0.0
  %34 = vadd.xlane.f32.xlu0 %v33
  %v35 = vpop.xlane.xlu0 %34
  %v36 = vmul.f32 %v32, %v23
  %v37 = vmul.f32 %v35, %v23
  %v38 = vadd.f32 %v36, 1e-05
  %v39 = vadd.f32 %v37, 1e-05
  %v40 = vrsqrt.pop %v38
  %v41 = vrsqrt.pop %v39
  %v42 = vmul.f32 %v26, %v40
  %v43 = vmul.f32 %v27, %v41
  %v44 = vld [vmem:[%s1] sm:$0x1]
  %v46 = vlaneseq
  %v47 = vshrl.u32 %v46, 7
  %v48 = vsub.s32 0, %v47
  %v49 = vrot.slane %v44, %v48
  %v51 = vmul.f32 %v42, %v49
  %v52 = vmul.f32 %v43, %v49
  %v53 = vld [vmem:[%s2] sm:$0x1]
  %v55 = vlaneseq
  %v56 = vshrl.u32 %v55, 7
  %v57 = vsub.s32 0, %v56
  %v58 = vrot.slane %v53, %v57
  %v60 = vadd.f32 %v51, %v58
  %v61 = vadd.f32 %v52, %v58
  %62 = vst.msk [vmem:[%s3] sm:$0xff] %vm16, %v60
  %63 = vst.msk [vmem:[%s3 + $0x8] sm:$0xff] %vm16, %v61
  // Predicated region
  $region14: #{block_forward.23} parent=0 // pred_check
    _
  $region15: #{block_forward.23} parent=0 // pred_check_branch
    %65 = sbr.rel (0) target = $region17
  $region16: #{block_forward.23} parent=0 // pred_region
    _
  $region17: #{block_forward.23} parent=0 // pred_fallthru
    _
  // Predicated region
  $region18: #{block_forward.23} parent=0 // pred_check
    _
  $region19: #{block_forward.23} parent=0 // pred_check_branch
    %67 = sbr.rel (0) target = $region21
  $region20: #{block_forward.23} parent=0 // pred_region
    _
  $region21: #{block_forward.23} parent=0 // pred_fallthru
    _

// kernel: block_forward.25
$region0: #{block_forward.25}
  #allocation0 [shape = 'u32[]', space=smem, size = 0x4, offset = 0x4, fixed_abs, tag = 'smem constant byte address 0x4 - core index']
  #allocation1 [shape = 'u32[144,128]{1,0:T(1,128)}', space=vmem, size = 0x12000, scoped, tag = 'internal scratch']
  %s0 = inlined_call_operand.vmem [shape: f32[2,4,8,8], index: 0, kind: input, shape index: {}]
  %s1 = inlined_call_operand.vmem [shape: f32[2,4,8,8], index: 1, kind: input, shape index: {}]
  %s2 = inlined_call_operand.vmem [shape: f32[2,4,8,8], index: 2, kind: input, shape index: {}]
  %s3 = inlined_call_operand.vmem [shape: f32[2,4,8,8], index: 3, kind: output, shape index: {}]
  %s4 = sld [smem:[#allocation0]]
  $region45: #{block_forward.25} parent=0
    _
  %s6 = ssub.s32 1, %s4
  %s7 = scalar_select 0, %s6, %s4
  loop: start=0, step=1, limit=10
  $region2: #{block_forward.25} parent=0 // loop_pre_header
    _
  $region3: #{block_forward.25} parent=0 // loop_header
    %s9 = sphi 0, %s13
    %p10 = scmp.ge.s32.totalorder %s9, 10
    %s16 = sphi 0, %s28
    %s17 = sphi 0, %s24
    %s18 = sphi 0, %s16
    %s19 = sphi 0, %s17
    %s20 = sphi 0, %s18
    %s21 = sphi 0, %s19
    %s33 = sphi 0, %s35
    %s36 = sphi 0, %s33
    %s37 = sphi 0, %s36
    %s53 = sphi 0, %s37
    %s61 = sphi 0, %s63
    %s64 = sphi 0, %s61
    %s65 = sphi 0, %s64
    %s81 = sphi 0, %s65
    %s89 = sphi 0, %s91
    %s92 = sphi 0, %s89
    %s93 = sphi 0, %s92
    %s109 = sphi 0, %s93
    %s117 = sphi 0, %s119
    %s120 = sphi 0, %s117
    %s121 = sphi 0, %s120
    %s137 = sphi 0, %s121
  $region4: #{block_forward.25} parent=0 // loop_header_branch
    %12 = sbr.rel (%p10) target = $region8
  $region5: #{block_forward.25} parent=0 // loop_body
    %s14 = ssub.s32 %s9, 1
    %s15 = ssub.s32 %s9, 2
    %s22 = sadd.s32 1, %s17
    %p23 = scmp.ge.s32.totalorder %s22, 4
    %s24 = scalar_select %p23, 0, %s22
    %s25 = sadd.s32 1, %s16
    %s26 = scalar_select %p23, %s25, %s16
    %p27 = scmp.ge.s32.totalorder %s26, 2
    %s28 = scalar_select %p27, 0, %s26
    %s29 = ssub.s32 %s16, %s28
    %s30 = ssub.s32 %s17, %s24
    %s31 = sor.u32 %s29, %s30
    %p32 = scmp.eq.s32.totalorder %s31, 0
    %s34 = sadd.s32 %s33, 1
    %s35 = scalar_select %p32, %s33, %s34
    %p38 = pneg %p32
    %p39 = scmp.eq.s32.totalorder %s9, 7
    %p40 = por %p38, %p39
    %p41 = scmp.ne.s32.totalorder %s33, %s36
    %p42 = scmp.eq.s32.totalorder %s9, 0
    %p43 = por %p41, %p42
    %p44 = scmp.ne.s32.totalorder %s33, %s36
    %p45 = scmp.eq.s32.totalorder %s14, 7
    %p46 = por %p44, %p45
    %p47 = scmp.ne.s32.totalorder %s36, %s37
    %p48 = scmp.eq.s32.totalorder %s14, 0
    %p49 = por %p47, %p48
    %p50 = scmp.ne.s32.totalorder %s36, %s37
    %p51 = scmp.eq.s32.totalorder %s15, 7
    %p52 = por %p50, %p51
    %p54 = scmp.ne.s32.totalorder %s37, %s53
    %p55 = scmp.eq.s32.totalorder %s15, 0
    %p56 = por %p54, %p55
    %s57 = ssub.s32 %s16, %s28
    %s58 = ssub.s32 %s17, %s24
    %s59 = sor.u32 %s57, %s58
    %p60 = scmp.eq.s32.totalorder %s59, 0
    %s62 = sadd.s32 %s61, 1
    %s63 = scalar_select %p60, %s61, %s62
    %p66 = pneg %p60
    %p67 = scmp.eq.s32.totalorder %s9, 7
    %p68 = por %p66, %p67
    %p69 = scmp.ne.s32.totalorder %s61, %s64
    %p70 = scmp.eq.s32.totalorder %s9, 0
    %p71 = por %p69, %p70
    %p72 = scmp.ne.s32.totalorder %s61, %s64
    %p73 = scmp.eq.s32.totalorder %s14, 7
    %p74 = por %p72, %p73
    %p75 = scmp.ne.s32.totalorder %s64, %s65
    %p76 = scmp.eq.s32.totalorder %s14, 0
    %p77 = por %p75, %p76
    %p78 = scmp.ne.s32.totalorder %s64, %s65
    %p79 = scmp.eq.s32.totalorder %s15, 7
    %p80 = por %p78, %p79
    %p82 = scmp.ne.s32.totalorder %s65, %s81
    %p83 = scmp.eq.s32.totalorder %s15, 0
    %p84 = por %p82, %p83
    %s85 = ssub.s32 %s16, %s28
    %s86 = ssub.s32 %s17, %s24
    %s87 = sor.u32 %s85, %s86
    %p88 = scmp.eq.s32.totalorder %s87, 0
    %s90 = sadd.s32 %s89, 1
    %s91 = scalar_select %p88, %s89, %s90
    %p94 = pneg %p88
    %p95 = scmp.eq.s32.totalorder %s9, 7
    %p96 = por %p94, %p95
    %p97 = scmp.ne.s32.totalorder %s89, %s92
    %p98 = scmp.eq.s32.totalorder %s9, 0
    %p99 = por %p97, %p98
    %p100 = scmp.ne.s32.totalorder %s89, %s92
    %p101 = scmp.eq.s32.totalorder %s14, 7
    %p102 = por %p100, %p101
    %p103 = scmp.ne.s32.totalorder %s92, %s93
    %p104 = scmp.eq.s32.totalorder %s14, 0
    %p105 = por %p103, %p104
    %p106 = scmp.ne.s32.totalorder %s92, %s93
    %p107 = scmp.eq.s32.totalorder %s15, 7
    %p108 = por %p106, %p107
    %p110 = scmp.ne.s32.totalorder %s93, %s109
    %p111 = scmp.eq.s32.totalorder %s15, 0
    %p112 = por %p110, %p111
    %s113 = ssub.s32 %s16, %s28
    %s114 = ssub.s32 %s17, %s24
    %s115 = sor.u32 %s113, %s114
    %p116 = scmp.eq.s32.totalorder %s115, 0
    %s118 = sadd.s32 %s117, 1
    %s119 = scalar_select %p116, %s117, %s118
    %p122 = pneg %p116
    %p123 = scmp.eq.s32.totalorder %s9, 7
    %p124 = por %p122, %p123
    %p125 = scmp.ne.s32.totalorder %s117, %s120
    %p126 = scmp.eq.s32.totalorder %s9, 0
    %p127 = por %p125, %p126
    %p128 = scmp.ne.s32.totalorder %s117, %s120
    %p129 = scmp.eq.s32.totalorder %s14, 7
    %p130 = por %p128, %p129
    %p131 = scmp.ne.s32.totalorder %s120, %s121
    %p132 = scmp.eq.s32.totalorder %s14, 0
    %p133 = por %p131, %p132
    %p134 = scmp.ne.s32.totalorder %s120, %s121
    %p135 = scmp.eq.s32.totalorder %s15, 7
    %p136 = por %p134, %p135
    %p138 = scmp.ne.s32.totalorder %s121, %s137
    %p139 = scmp.eq.s32.totalorder %s15, 0
    %p140 = por %p138, %p139
    %p141 = scmp.le.s32.totalorder 1, %s9
    %p142 = scmp.lt.s32.totalorder %s9, 9
    %p143 = pnand %p141, %p142
    %p144 = pneg %p143
    // Predicated region
    $region9: #{block_forward.25} parent=5 // pred_check
      _
    $region10: #{block_forward.25} parent=5 // pred_check_branch
      %146 = sbr.rel (%p143) target = $region12
    $region11: #{block_forward.25} parent=5 // pred_region
      %s147 = ssub.s32 %s9, 1
    $region12: #{block_forward.25} parent=5 // pred_fallthru
      _
    %p148 = scmp.lt.s32.totalorder %s9, 8
    // Predicated region
    $region13: #{block_forward.25} parent=5 // pred_check
      %p149 = pneg %p148
    $region14: #{block_forward.25} parent=5 // pred_check_branch
      %151 = sbr.rel (%p149) target = $region16
    $region15: #{block_forward.25} parent=5 // pred_region
      // Predicated region
      $region17: #{block_forward.25} parent=15 // pred_check
        %p152 = pneg %p43
      $region18: #{block_forward.25} parent=15 // pred_check_branch
        %154 = sbr.rel (%p152) target = $region20
      $region19: #{block_forward.25} parent=15 // pred_region
        %p155 = scmp.lt.s32.totalorder %s16, 1
        %s156 = scalar_select %p155, %s16, 1
        %p157 = scmp.lt.s32.totalorder %s17, 3
        %s158 = scalar_select %p157, %s17, 3
        %s159 = smul.addr %s156, 4
        %s160 = sadd.s32 %s158, %s159
        %s161 = smul.addr %s160, 8
        %s162 = scalar_lea.vmem %s0, %s161
      $region20: #{block_forward.25} parent=15 // pred_fallthru
        _
      // Predicated region
      $region21: #{block_forward.25} parent=15 // pred_check
        %p163 = pneg %p71
      $region22: #{block_forward.25} parent=15 // pred_check_branch
        %165 = sbr.rel (%p163) target = $region24
      $region23: #{block_forward.25} parent=15 // pred_region
        %p166 = scmp.lt.s32.totalorder %s16, 1
        %s167 = scalar_select %p166, %s16, 1
        %p168 = scmp.lt.s32.totalorder %s17, 3
        %s169 = scalar_select %p168, %s17, 3
        %s170 = smul.addr %s167, 4
        %s171 = sadd.s32 %s169, %s170
        %s172 = smul.addr %s171, 8
        %s173 = scalar_lea.vmem %s1, %s172
      $region24: #{block_forward.25} parent=15 // pred_fallthru
        _
      // Predicated region
      $region25: #{block_forward.25} parent=15 // pred_check
        %p174 = pneg %p99
      $region26: #{block_forward.25} parent=15 // pred_check_branch
        %176 = sbr.rel (%p174) target = $region28
      $region27: #{block_forward.25} parent=15 // pred_region
        %p177 = scmp.lt.s32.totalorder %s16, 1
        %s178 = scalar_select %p177, %s16, 1
        %p179 = scmp.lt.s32.totalorder %s17, 3
        %s180 = scalar_select %p179, %s17, 3
        %s181 = smul.addr %s178, 4
        %s182 = sadd.s32 %s180, %s181
        %s183 = smul.addr %s182, 8
        %s184 = scalar_lea.vmem %s2, %s183
      $region28: #{block_forward.25} parent=15 // pred_fallthru
        _
    $region16: #{block_forward.25} parent=5 // pred_fallthru
      _
    %p185 = scmp.le.s32.totalorder 1, %s9
    %p186 = scmp.lt.s32.totalorder %s9, 9
    %p187 = pnand %p185, %p186
    %p188 = pneg %p187
    // Predicated region
    $region29: #{block_forward.25} parent=5 // pred_check
      _
    $region30: #{block_forward.25} parent=5 // pred_check_branch
      %190 = sbr.rel (%p187) target = $region32
    $region31: #{block_forward.25} parent=5 // pred_region
      %s191 = ssub.s32 %s9, 1
      %p192 = scmp.lt.s32.totalorder %s18, 1
      %s193 = scalar_select %p192, %s18, 1
      %p194 = scmp.lt.s32.totalorder %s19, 3
      %s195 = scalar_select %p194, %s19, 3
      %s196 = smul.addr %s193, 4
      %s197 = sadd.s32 %s195, %s196
      %s198 = smul.addr %s197, 8
      %s199 = scalar_lea.vmem %s0, %s198
      %p200 = pneg %p49
      %p201 = pneg %p46
      %p202 = scmp.lt.s32.totalorder %s18, 1
      %s203 = scalar_select %p202, %s18, 1
      %p204 = scmp.lt.s32.totalorder %s19, 3
      %s205 = scalar_select %p204, %s19, 3
      %s206 = smul.addr %s203, 4
      %s207 = sadd.s32 %s205, %s206
      %s208 = smul.addr %s207, 8
      %s209 = scalar_lea.vmem %s1, %s208
      %p210 = pneg %p77
      %p211 = pneg %p74
      %p212 = scmp.lt.s32.totalorder %s18, 1
      %s213 = scalar_select %p212, %s18, 1
      %p214 = scmp.lt.s32.totalorder %s19, 3
      %s215 = scalar_select %p214, %s19, 3
      %s216 = smul.addr %s213, 4
      %s217 = sadd.s32 %s215, %s216
      %s218 = smul.addr %s217, 8
      %s219 = scalar_lea.vmem %s2, %s218
      %p220 = pneg %p105
      %p221 = pneg %p102
      %p222 = pneg %p133
      %p223 = pneg %p130
      %p224 = scmp.lt.s32.totalorder %s18, 1
      %s225 = scalar_select %p224, %s18, 1
      %p226 = scmp.lt.s32.totalorder %s19, 3
      %s227 = scalar_select %p226, %s19, 3
      %s228 = smul.addr %s225, 4
      %s229 = sadd.s32 %s227, %s228
      %s230 = smul.addr %s229, 8
      %s231 = scalar_lea.vmem %s3, %s230
      %p232 = scmp.lt.s32.totalorder %s18, 1
      %s233 = scalar_select %p232, %s18, 1
      %p234 = scmp.lt.s32.totalorder %s19, 3
      %s235 = scalar_select %p234, %s19, 3
      %s236 = smul.addr %s233, 4
      %s237 = sadd.s32 %s235, %s236
      %s238 = smul.addr %s237, 8
      %s239 = scalar_lea.vmem %s0, %s238
      %p240 = scmp.lt.s32.totalorder %s18, 1
      %s241 = scalar_select %p240, %s18, 1
      %p242 = scmp.lt.s32.totalorder %s19, 3
      %s243 = scalar_select %p242, %s19, 3
      %s244 = smul.addr %s241, 4
      %s245 = sadd.s32 %s243, %s244
      %s246 = smul.addr %s245, 8
      %s247 = scalar_lea.vmem %s1, %s246
      %p248 = scmp.lt.s32.totalorder %s18, 1
      %s249 = scalar_select %p248, %s18, 1
      %p250 = scmp.lt.s32.totalorder %s19, 3
      %s251 = scalar_select %p250, %s19, 3
      %s252 = smul.addr %s249, 4
      %s253 = sadd.s32 %s251, %s252
      %s254 = smul.addr %s253, 8
      %s255 = scalar_lea.vmem %s2, %s254
      %p256 = scmp.lt.s32.totalorder %s18, 1
      %s257 = scalar_select %p256, %s18, 1
      %p258 = scmp.lt.s32.totalorder %s19, 3
      %s259 = scalar_select %p258, %s19, 3
      %s260 = smul.addr %s257, 4
      %s261 = sadd.s32 %s259, %s260
      %s262 = smul.addr %s261, 8
      %s263 = scalar_lea.vmem %s3, %s262
      %v264 = vld [vmem:[%s239] sm:$0xff]
      %v265 = vld [vmem:[%s247] sm:$0xff]
      %vm266 = vcmask 64512
      %v268 = vsel %vm266, %v264, 0
      %v271 = vsel %vm266, %v265, 0
      %273 = vmatprep.subr.mxu0 0.0
      %274 = vmatpush1.xpose.msra.mxu0 0.0
      %275 = vmatprep.subr.mxu0 0.0
      %276 = vmatpush1.xpose.msra.mxu0 0.0
      %277 = vmatprep.subr.mxu0 0.0
      %278 = vmatpush1.xpose.msra.mxu0 0.0
      %279 = vmatprep.subr.mxu0 0.0
      %280 = vmatpush1.xpose.msra.mxu0 0.0
      %281 = vmatprep.subr.mxu0 0.0
      %282 = vmatpush1.xpose.msra.mxu0 0.0
      %283 = vmatprep.subr.mxu0 0.0
      %284 = vmatpush1.xpose.msra.mxu0 0.0
      %285 = vmatprep.subr.mxu0 0.0
      %286 = vmatpush1.xpose.msra.mxu0 0.0
      %287 = vmatprep.subr.mxu0 0.0
      %288 = vmatpush1.xpose.msra.mxu0 0.0
      %289 = vmatprep.subr.mxu0 0.0
      %290 = vmatpush1.xpose.msra.mxu0 0.0
      %291 = vmatprep.subr.mxu0 0.0
      %292 = vmatpush1.xpose.msra.mxu0 0.0
      %293 = vmatprep.subr.mxu0 0.0
      %294 = vmatpush1.xpose.msra.mxu0 0.0
      %295 = vmatprep.subr.mxu0 0.0
      %296 = vmatpush1.xpose.msra.mxu0 0.0
      %297 = vmatprep.subr.mxu0 0.0
      %298 = vmatpush1.xpose.msra.mxu0 0.0
      %299 = vmatprep.subr.mxu0 0.0
      %300 = vmatpush1.xpose.msra.mxu0 0.0
      %301 = vmatprep.subr.mxu0 0.0
      %302 = vmatpush1.xpose.msra.mxu0 0.0
      %303 = vmatprep.subr.mxu0 0.0
      %304 = vmatpush1.xpose.msra.mxu0 %v271
      %305 = vmatprep.subr.mxu0 0.0
      %306 = vmatpush2.xpose.msra.mxu0 0.0
      %307 = vmatprep.subr.mxu0 0.0
      %308 = vmatpush2.xpose.msra.mxu0 0.0
      %309 = vmatprep.subr.mxu0 0.0
      %310 = vmatpush2.xpose.msra.mxu0 0.0
      %311 = vmatprep.subr.mxu0 0.0
      %312 = vmatpush2.xpose.msra.mxu0 0.0
      %313 = vmatprep.subr.mxu0 0.0
      %314 = vmatpush2.xpose.msra.mxu0 0.0
      %315 = vmatprep.subr.mxu0 0.0
      %316 = vmatpush2.xpose.msra.mxu0 0.0
      %317 = vmatprep.subr.mxu0 0.0
      %318 = vmatpush2.xpose.msra.mxu0 0.0
      %319 = vmatprep.subr.mxu0 0.0
      %320 = vmatpush2.xpose.msra.mxu0 0.0
      %321 = vmatprep.subr.mxu0 0.0
      %322 = vmatpush2.xpose.msra.mxu0 0.0
      %323 = vmatprep.subr.mxu0 0.0
      %324 = vmatpush2.xpose.msra.mxu0 0.0
      %325 = vmatprep.subr.mxu0 0.0
      %326 = vmatpush2.xpose.msra.mxu0 0.0
      %327 = vmatprep.subr.mxu0 0.0
      %328 = vmatpush2.xpose.msra.mxu0 0.0
      %329 = vmatprep.subr.mxu0 0.0
      %330 = vmatpush2.xpose.msra.mxu0 0.0
      %331 = vmatprep.subr.mxu0 0.0
      %332 = vmatpush2.xpose.msra.mxu0 0.0
      %333 = vmatprep.subr.mxu0 0.0
      %334 = vmatpush2.xpose.msra.mxu0 0.0
      %335 = vmatprep.subr.mxu0 0.0
      %336 = vmatpush2.xpose.msra.mxu0 0.0
      %337 = vmatprep.mubr.f32.mxu0 0.0
      %338 = vmatmul.mubr.f32.gmra.mxu0 %v268
      %v339 = vpop.f32.mrf.mxu0
      %v340 = vadd.f32 0.0, %v339
      %v341 = vpop.f32.mrf.mxu0
      %342 = vdwg.mxu0
      %v343 = vmul.f32 %v340, 0.35355338
      %v344 = vsel %vm266, %v343, -inf
      %345 = vmax.xlane.f32.xlu0 %v344
      %v346 = vpop.xlane.xlu0 %345
      %v347 = vsub.f32 %v343, %v346
      %v348 = vmul.f32 %v347, 1.442695
      %v349 = vpow.pop %v348
      %v350 = vsel %vm266, %v349, 0.0
      %351 = vadd.xlane.f32.xlu0 %v350
      %v352 = vpop.xlane.xlu0 %351
      %v353 = vrcp.pop %v352
      %v354 = vmul.f32 %v349, %v353
      %v355 = vld [vmem:[%s255] sm:$0xff]
      %v357 = vsel %vm266, %v354, 0
      %359 = vmatprep.subr.mxu0 0.0
      %360 = vmatpush1.msra.mxu0 0.0
      %361 = vmatprep.subr.mxu0 0.0
      %362 = vmatpush1.msra.mxu0 0.0
      %363 = vmatprep.subr.mxu0 0.0
      %364 = vmatpush1.msra.mxu0 0.0
      %365 = vmatprep.subr.mxu0 0.0
      %366 = vmatpush1.msra.mxu0 0.0
      %367 = vmatprep.subr.mxu0 0.0
      %368 = vmatpush1.msra.mxu0 0.0
      %369 = vmatprep.subr.mxu0 0.0
      %370 = vmatpush1.msra.mxu0 0.0
      %371 = vmatprep.subr.mxu0 0.0
      %372 = vmatpush1.msra.mxu0 0.0
      %373 = vmatprep.subr.mxu0 0.0
      %374 = vmatpush1.msra.mxu0 0.0
      %375 = vmatprep.subr.mxu0 0.0
      %376 = vmatpush1.msra.mxu0 0.0
      %377 = vmatprep.subr.mxu0 0.0
      %378 = vmatpush1.msra.mxu0 0.0
      %379 = vmatprep.subr.mxu0 0.0
      %380 = vmatpush1.msra.mxu0 0.0
      %381 = vmatprep.subr.mxu0 0.0
      %382 = vmatpush1.msra.mxu0 0.0
      %383 = vmatprep.subr.mxu0 0.0
      %384 = vmatpush1.msra.mxu0 0.0
      %385 = vmatprep.subr.mxu0 0.0
      %386 = vmatpush1.msra.mxu0 0.0
      %387 = vmatprep.subr.mxu0 0.0
      %388 = vmatpush1.msra.mxu0 0.0
      %389 = vmatprep.subr.mxu0 0.0
      %390 = vmatpush1.msra.mxu0 %v355
      %391 = vmatprep.subr.mxu0 0.0
      %392 = vmatpush2.msra.mxu0 0.0
      %393 = vmatprep.subr.mxu0 0.0
      %394 = vmatpush2.msra.mxu0 0.0
      %395 = vmatprep.subr.mxu0 0.0
      %396 = vmatpush2.msra.mxu0 0.0
      %397 = vmatprep.subr.mxu0 0.0
      %398 = vmatpush2.msra.mxu0 0.0
      %399 = vmatprep.subr.mxu0 0.0
      %400 = vmatpush2.msra.mxu0 0.0
      %401 = vmatprep.subr.mxu0 0.0
      %402 = vmatpush2.msra.mxu0 0.0
      %403 = vmatprep.subr.mxu0 0.0
      %404 = vmatpush2.msra.mxu0 0.0
      %405 = vmatprep.subr.mxu0 0.0
      %406 = vmatpush2.msra.mxu0 0.0
      %407 = vmatprep.subr.mxu0 0.0
      %408 = vmatpush2.msra.mxu0 0.0
      %409 = vmatprep.subr.mxu0 0.0
      %410 = vmatpush2.msra.mxu0 0.0
      %411 = vmatprep.subr.mxu0 0.0
      %412 = vmatpush2.msra.mxu0 0.0
      %413 = vmatprep.subr.mxu0 0.0
      %414 = vmatpush2.msra.mxu0 0.0
      %415 = vmatprep.subr.mxu0 0.0
      %416 = vmatpush2.msra.mxu0 0.0
      %417 = vmatprep.subr.mxu0 0.0
      %418 = vmatpush2.msra.mxu0 0.0
      %419 = vmatprep.subr.mxu0 0.0
      %420 = vmatpush2.msra.mxu0 0.0
      %421 = vmatprep.subr.mxu0 0.0
      %422 = vmatpush2.msra.mxu0 0.0
      %423 = vmatprep.mubr.f32.mxu0 0.0
      %424 = vmatmul.mubr.f32.gmra.mxu0 %v357
      %v425 = vpop.f32.mrf.mxu0
      %v426 = vadd.f32 0.0, %v425
      %v427 = vpop.f32.mrf.mxu0
      %428 = vdwg.mxu0
      %429 = vst.msk [vmem:[%s263] sm:$0xff] %vm266, %v426
      %p430 = scmp.lt.s32.totalorder %s18, 1
      %s431 = scalar_select %p430, %s18, 1
      %p432 = scmp.lt.s32.totalorder %s19, 3
      %s433 = scalar_select %p432, %s19, 3
      %s434 = smul.addr %s431, 4
      %s435 = sadd.s32 %s433, %s434
      %s436 = smul.addr %s435, 8
      %s437 = scalar_lea.vmem %s3, %s436
      // Predicated region
      $region33: #{block_forward.25} parent=31 // pred_check
        %p438 = pneg %p130
      $region34: #{block_forward.25} parent=31 // pred_check_branch
        %440 = sbr.rel (%p438) target = $region36
      $region35: #{block_forward.25} parent=31 // pred_region
        _
      $region36: #{block_forward.25} parent=31 // pred_fallthru
        _
    $region32: #{block_forward.25} parent=5 // pred_fallthru
      _
    %p441 = scmp.le.s32.totalorder 2, %s9
    // Predicated region
    $region37: #{block_forward.25} parent=5 // pred_check
      %p442 = pneg %p441
    $region38: #{block_forward.25} parent=5 // pred_check_branch
      %444 = sbr.rel (%p442) target = $region40
    $region39: #{block_forward.25} parent=5 // pred_region
      %s445 = ssub.s32 %s9, 2
      // Predicated region
      $region41: #{block_forward.25} parent=39 // pred_check
        %p446 = pneg %p136
      $region42: #{block_forward.25} parent=39 // pred_check_branch
        %448 = sbr.rel (%p446) target = $region44
      $region43: #{block_forward.25} parent=39 // pred_region
        %p449 = scmp.lt.s32.totalorder %s20, 1
        %s450 = scalar_select %p449, %s20, 1
        %p451 = scmp.lt.s32.totalorder %s21, 3
        %s452 = scalar_select %p451, %s21, 3
        %s453 = smul.addr %s450, 4
        %s454 = sadd.s32 %s452, %s453
        %s455 = smul.addr %s454, 8
        %s456 = scalar_lea.vmem %s3, %s455
      $region44: #{block_forward.25} parent=39 // pred_fallthru
        _
    $region40: #{block_forward.25} parent=5 // pred_fallthru
      _
  $region6: #{block_forward.25} parent=0 // loop_footer
    %s13 = sadd.s32 1, %s9
  $region7: #{block_forward.25} parent=0 // loop_footer_branch
    %8 = sbr.rel target = $region3
  $region8: #{block_forward.25} parent=0 // loop_exit
    _

// kernel: block_forward.26
$region0: #{block_forward.26}
  #allocation0 [shape = 'u32[]', space=smem, size = 0x4, offset = 0x4, fixed_abs, tag = 'smem constant byte address 0x4 - core index']
  #allocation1 [shape = 'u32[144,128]{1,0:T(1,128)}', space=vmem, size = 0x12000, scoped, tag = 'internal scratch']
  %s0 = inlined_call_operand.vmem [shape: f32[16,32], index: 0, kind: input, shape index: {}]
  %s1 = inlined_call_operand.vmem [shape: f32[32,32], index: 1, kind: input, shape index: {}]
  %s2 = inlined_call_operand.vmem [shape: f32[1,32], index: 2, kind: input, shape index: {}]
  %s3 = inlined_call_operand.vmem [shape: f32[16,32], index: 3, kind: output, shape index: {}]
  %s4 = sld [smem:[#allocation0]]
  $region22: #{block_forward.26} parent=0
    _
  %s6 = ssub.s32 1, %s4
  %s7 = scalar_select 0, %s6, %s4
  // Predicated region
  $region2: #{block_forward.26} parent=0 // pred_check
    _
  $region3: #{block_forward.26} parent=0 // pred_check_branch
    %9 = sbr.rel (0) target = $region5
  $region4: #{block_forward.26} parent=0 // pred_region
    _
  $region5: #{block_forward.26} parent=0 // pred_fallthru
    _
  // Predicated region
  $region6: #{block_forward.26} parent=0 // pred_check
    _
  $region7: #{block_forward.26} parent=0 // pred_check_branch
    %11 = sbr.rel (0) target = $region9
  $region8: #{block_forward.26} parent=0 // pred_region
    _
  $region9: #{block_forward.26} parent=0 // pred_fallthru
    _
  // Predicated region
  $region10: #{block_forward.26} parent=0 // pred_check
    _
  $region11: #{block_forward.26} parent=0 // pred_check_branch
    %13 = sbr.rel (0) target = $region13
  $region12: #{block_forward.26} parent=0 // pred_region
    _
  $region13: #{block_forward.26} parent=0 // pred_fallthru
    _
  %v14 = vld [vmem:[%s0] sm:$0xff]
  %v15 = vld [vmem:[%s0 + $0x8] sm:$0xff]
  %v16 = vld [vmem:[%s1] sm:$0xff]
  %v17 = vld [vmem:[%s1 + $0x8] sm:$0xff]
  %v18 = vld [vmem:[%s1 + $0x10] sm:$0xff]
  %v19 = vld [vmem:[%s1 + $0x18] sm:$0xff]
  %v20 = vld [vmem:[%s2] sm:$0x1]
  %v22 = vlaneseq
  %v23 = vshrl.u32 %v22, 7
  %v24 = vsub.s32 0, %v23
  %v25 = vrot.slane %v20, %v24
  %vm27 = vcmask 261120
  %v29 = vsel %vm27, %v14, 0
  %v32 = vsel %vm27, %v15, 0
  %34 = vmatprep.subr.mxu0 0.0
  %35 = vmatpush1.msra.mxu0 0.0
  %36 = vmatprep.subr.mxu0 0.0
  %37 = vmatpush1.msra.mxu0 0.0
  %38 = vmatprep.subr.mxu0 0.0
  %39 = vmatpush1.msra.mxu0 0.0
  %40 = vmatprep.subr.mxu0 0.0
  %41 = vmatpush1.msra.mxu0 0.0
  %42 = vmatprep.subr.mxu0 0.0
  %43 = vmatpush1.msra.mxu0 0.0
  %44 = vmatprep.subr.mxu0 0.0
  %45 = vmatpush1.msra.mxu0 0.0
  %46 = vmatprep.subr.mxu0 0.0
  %47 = vmatpush1.msra.mxu0 0.0
  %48 = vmatprep.subr.mxu0 0.0
  %49 = vmatpush1.msra.mxu0 0.0
  %50 = vmatprep.subr.mxu0 0.0
  %51 = vmatpush1.msra.mxu0 0.0
  %52 = vmatprep.subr.mxu0 0.0
  %53 = vmatpush1.msra.mxu0 0.0
  %54 = vmatprep.subr.mxu0 0.0
  %55 = vmatpush1.msra.mxu0 0.0
  %56 = vmatprep.subr.mxu0 0.0
  %57 = vmatpush1.msra.mxu0 0.0
  %58 = vmatprep.subr.mxu0 0.0
  %59 = vmatpush1.msra.mxu0 %v19
  %60 = vmatprep.subr.mxu0 0.0
  %61 = vmatpush1.msra.mxu0 %v18
  %62 = vmatprep.subr.mxu0 0.0
  %63 = vmatpush1.msra.mxu0 %v17
  %64 = vmatprep.subr.mxu0 0.0
  %65 = vmatpush1.msra.mxu0 %v16
  %66 = vmatprep.subr.mxu0 0.0
  %67 = vmatpush2.msra.mxu0 0.0
  %68 = vmatprep.subr.mxu0 0.0
  %69 = vmatpush2.msra.mxu0 0.0
  %70 = vmatprep.subr.mxu0 0.0
  %71 = vmatpush2.msra.mxu0 0.0
  %72 = vmatprep.subr.mxu0 0.0
  %73 = vmatpush2.msra.mxu0 0.0
  %74 = vmatprep.subr.mxu0 0.0
  %75 = vmatpush2.msra.mxu0 0.0
  %76 = vmatprep.subr.mxu0 0.0
  %77 = vmatpush2.msra.mxu0 0.0
  %78 = vmatprep.subr.mxu0 0.0
  %79 = vmatpush2.msra.mxu0 0.0
  %80 = vmatprep.subr.mxu0 0.0
  %81 = vmatpush2.msra.mxu0 0.0
  %82 = vmatprep.subr.mxu0 0.0
  %83 = vmatpush2.msra.mxu0 0.0
  %84 = vmatprep.subr.mxu0 0.0
  %85 = vmatpush2.msra.mxu0 0.0
  %86 = vmatprep.subr.mxu0 0.0
  %87 = vmatpush2.msra.mxu0 0.0
  %88 = vmatprep.subr.mxu0 0.0
  %89 = vmatpush2.msra.mxu0 0.0
  %90 = vmatprep.subr.mxu0 0.0
  %91 = vmatpush2.msra.mxu0 0.0
  %92 = vmatprep.subr.mxu0 0.0
  %93 = vmatpush2.msra.mxu0 0.0
  %94 = vmatprep.subr.mxu0 0.0
  %95 = vmatpush2.msra.mxu0 0.0
  %96 = vmatprep.subr.mxu0 0.0
  %97 = vmatpush2.msra.mxu0 0.0
  %98 = vmatprep.mubr.f32.mxu0 0.0
  %99 = vmatmul.mubr.f32.gmra.mxu0 %v29
  %v100 = vpop.f32.mrf.mxu0
  %v101 = vadd.f32 %v25, %v100
  %v102 = vpop.f32.mrf.mxu0
  %103 = vmatprep.mubr.f32.mxu0 0.0
  %104 = vmatmul.mubr.f32.gmra.mxu0 %v32
  %v105 = vpop.f32.mrf.mxu0
  %v106 = vadd.f32 %v25, %v105
  %v107 = vpop.f32.mrf.mxu0
  %108 = vdwg.mxu0
  %109 = vst.msk [vmem:[%s3] sm:$0xff] %vm27, %v101
  %110 = vst.msk [vmem:[%s3 + $0x8] sm:$0xff] %vm27, %v106
  // Predicated region
  $region14: #{block_forward.26} parent=0 // pred_check
    _
  $region15: #{block_forward.26} parent=0 // pred_check_branch
    %112 = sbr.rel (0) target = $region17
  $region16: #{block_forward.26} parent=0 // pred_region
    _
  $region17: #{block_forward.26} parent=0 // pred_fallthru
    _
  // Predicated region
  $region18: #{block_forward.26} parent=0 // pred_check
    _
  $region19: #{block_forward.26} parent=0 // pred_check_branch
    %114 = sbr.rel (0) target = $region21
  $region20: #{block_forward.26} parent=0 // pred_region
    _
  $region21: #{block_forward.26} parent=0 // pred_fallthru
    _

// kernel: block_forward.27
$region0: #{block_forward.27}
  #allocation0 [shape = 'u32[]', space=smem, size = 0x4, offset = 0x4, fixed_abs, tag = 'smem constant byte address 0x4 - core index']
  #allocation1 [shape = 'u32[144,128]{1,0:T(1,128)}', space=vmem, size = 0x12000, scoped, tag = 'internal scratch']
  %s0 = inlined_call_operand.vmem [shape: f32[2,256], index: 0, kind: input, shape index: {}]
  %s1 = inlined_call_operand.vmem [shape: f32[2,256], index: 1, kind: input, shape index: {}]
  %s2 = inlined_call_operand.vmem [shape: f32[2,1], index: 2, kind: input, shape index: {}]
  %s3 = inlined_call_operand.vmem [shape: f32[2,256], index: 3, kind: output, shape index: {}]
  %s4 = sld [smem:[#allocation0]]
  $region22: #{block_forward.27} parent=0
    _
  %s6 = ssub.s32 1, %s4
  %s7 = scalar_select 0, %s6, %s4
  // Predicated region
  $region2: #{block_forward.27} parent=0 // pred_check
    _
  $region3: #{block_forward.27} parent=0 // pred_check_branch
    %9 = sbr.rel (0) target = $region5
  $region4: #{block_forward.27} parent=0 // pred_region
    _
  $region5: #{block_forward.27} parent=0 // pred_fallthru
    _
  // Predicated region
  $region6: #{block_forward.27} parent=0 // pred_check
    _
  $region7: #{block_forward.27} parent=0 // pred_check_branch
    %11 = sbr.rel (0) target = $region9
  $region8: #{block_forward.27} parent=0 // pred_region
    _
  $region9: #{block_forward.27} parent=0 // pred_fallthru
    _
  // Predicated region
  $region10: #{block_forward.27} parent=0 // pred_check
    _
  $region11: #{block_forward.27} parent=0 // pred_check_branch
    %13 = sbr.rel (0) target = $region13
  $region12: #{block_forward.27} parent=0 // pred_region
    _
  $region13: #{block_forward.27} parent=0 // pred_fallthru
    _
  %v14 = vld [vmem:[%s2] sm:$0x3]
  %v15 = vld [vmem:[%s0] sm:$0xf]
  %v16 = vld [vmem:[%s1] sm:$0xf]
  %18 = vset.pattern.permute.xlu0 0
  %19 = vperm.xlu0 %18, %v14
  %v20 = vpop.permute.xlu0 %19
  %v22 = vunpack.c.l.s4 269488144
  %v23 = vunpack.c.0.s8 %v22
  %v24 = vlaneseq
  %v25 = vshrl.u32 %v24, 7
  %v26 = vsub.s32 %v23, %v25
  %v27 = vrot.slane %v20, %v26
  %v29 = vmul.f32 %v16, %v27
  %v30 = vadd.f32 %v15, %v29
  %31 = vst [vmem:[%s3] sm:$0xf] %v30
  // Predicated region
  $region14: #{block_forward.27} parent=0 // pred_check
    _
  $region15: #{block_forward.27} parent=0 // pred_check_branch
    %33 = sbr.rel (0) target = $region17
  $region16: #{block_forward.27} parent=0 // pred_region
    _
  $region17: #{block_forward.27} parent=0 // pred_fallthru
    _
  // Predicated region
  $region18: #{block_forward.27} parent=0 // pred_check
    _
  $region19: #{block_forward.27} parent=0 // pred_check_branch
    %35 = sbr.rel (0) target = $region21
  $region20: #{block_forward.27} parent=0 // pred_region
    _
  $region21: #{block_forward.27} parent=0 // pred_fallthru
    _

// kernel: block_forward.29
$region0: #{block_forward.29}
  #allocation0 [shape = 'u32[]', space=smem, size = 0x4, offset = 0x4, fixed_abs, tag = 'smem constant byte address 0x4 - core index']
  #allocation1 [shape = 'u32[144,128]{1,0:T(1,128)}', space=vmem, size = 0x12000, scoped, tag = 'internal scratch']
  %s0 = inlined_call_operand.vmem [shape: f32[16,32], index: 0, kind: input, shape index: {}]
  %s1 = inlined_call_operand.vmem [shape: f32[32,128], index: 1, kind: input, shape index: {}]
  %s2 = inlined_call_operand.vmem [shape: f32[1,128], index: 2, kind: input, shape index: {}]
  %s3 = inlined_call_operand.vmem [shape: f32[16,128], index: 3, kind: output, shape index: {}]
  %s4 = sld [smem:[#allocation0]]
  $region22: #{block_forward.29} parent=0
    _
  %s6 = ssub.s32 1, %s4
  %s7 = scalar_select 0, %s6, %s4
  // Predicated region
  $region2: #{block_forward.29} parent=0 // pred_check
    _
  $region3: #{block_forward.29} parent=0 // pred_check_branch
    %9 = sbr.rel (0) target = $region5
  $region4: #{block_forward.29} parent=0 // pred_region
    _
  $region5: #{block_forward.29} parent=0 // pred_fallthru
    _
  // Predicated region
  $region6: #{block_forward.29} parent=0 // pred_check
    _
  $region7: #{block_forward.29} parent=0 // pred_check_branch
    %11 = sbr.rel (0) target = $region9
  $region8: #{block_forward.29} parent=0 // pred_region
    _
  $region9: #{block_forward.29} parent=0 // pred_fallthru
    _
  // Predicated region
  $region10: #{block_forward.29} parent=0 // pred_check
    _
  $region11: #{block_forward.29} parent=0 // pred_check_branch
    %13 = sbr.rel (0) target = $region13
  $region12: #{block_forward.29} parent=0 // pred_region
    _
  $region13: #{block_forward.29} parent=0 // pred_fallthru
    _
  %v14 = vld [vmem:[%s0] sm:$0xff]
  %v15 = vld [vmem:[%s0 + $0x8] sm:$0xff]
  %v16 = vld [vmem:[%s1] sm:$0xff]
  %v17 = vld [vmem:[%s1 + $0x8] sm:$0xff]
  %v18 = vld [vmem:[%s1 + $0x10] sm:$0xff]
  %v19 = vld [vmem:[%s1 + $0x18] sm:$0xff]
  %v20 = vld [vmem:[%s2] sm:$0x1]
  %v22 = vlaneseq
  %v23 = vshrl.u32 %v22, 7
  %v24 = vsub.s32 0, %v23
  %v25 = vrot.slane %v20, %v24
  %vm27 = vcmask 261120
  %v29 = vsel %vm27, %v14, 0
  %v32 = vsel %vm27, %v15, 0
  %34 = vmatprep.subr.mxu0 0.0
  %35 = vmatpush1.msra.mxu0 0.0
  %36 = vmatprep.subr.mxu0 0.0
  %37 = vmatpush1.msra.mxu0 0.0
  %38 = vmatprep.subr.mxu0 0.0
  %39 = vmatpush1.msra.mxu0 0.0
  %40 = vmatprep.subr.mxu0 0.0
  %41 = vmatpush1.msra.mxu0 0.0
  %42 = vmatprep.subr.mxu0 0.0
  %43 = vmatpush1.msra.mxu0 0.0
  %44 = vmatprep.subr.mxu0 0.0
  %45 = vmatpush1.msra.mxu0 0.0
  %46 = vmatprep.subr.mxu0 0.0
  %47 = vmatpush1.msra.mxu0 0.0
  %48 = vmatprep.subr.mxu0 0.0
  %49 = vmatpush1.msra.mxu0 0.0
  %50 = vmatprep.subr.mxu0 0.0
  %51 = vmatpush1.msra.mxu0 0.0
  %52 = vmatprep.subr.mxu0 0.0
  %53 = vmatpush1.msra.mxu0 0.0
  %54 = vmatprep.subr.mxu0 0.0
  %55 = vmatpush1.msra.mxu0 0.0
  %56 = vmatprep.subr.mxu0 0.0
  %57 = vmatpush1.msra.mxu0 0.0
  %58 = vmatprep.subr.mxu0 0.0
  %59 = vmatpush1.msra.mxu0 %v19
  %60 = vmatprep.subr.mxu0 0.0
  %61 = vmatpush1.msra.mxu0 %v18
  %62 = vmatprep.subr.mxu0 0.0
  %63 = vmatpush1.msra.mxu0 %v17
  %64 = vmatprep.subr.mxu0 0.0
  %65 = vmatpush1.msra.mxu0 %v16
  %66 = vmatprep.subr.mxu0 0.0
  %67 = vmatpush2.msra.mxu0 0.0
  %68 = vmatprep.subr.mxu0 0.0
  %69 = vmatpush2.msra.mxu0 0.0
  %70 = vmatprep.subr.mxu0 0.0
  %71 = vmatpush2.msra.mxu0 0.0
  %72 = vmatprep.subr.mxu0 0.0
  %73 = vmatpush2.msra.mxu0 0.0
  %74 = vmatprep.subr.mxu0 0.0
  %75 = vmatpush2.msra.mxu0 0.0
  %76 = vmatprep.subr.mxu0 0.0
  %77 = vmatpush2.msra.mxu0 0.0
  %78 = vmatprep.subr.mxu0 0.0
  %79 = vmatpush2.msra.mxu0 0.0
  %80 = vmatprep.subr.mxu0 0.0
  %81 = vmatpush2.msra.mxu0 0.0
  %82 = vmatprep.subr.mxu0 0.0
  %83 = vmatpush2.msra.mxu0 0.0
  %84 = vmatprep.subr.mxu0 0.0
  %85 = vmatpush2.msra.mxu0 0.0
  %86 = vmatprep.subr.mxu0 0.0
  %87 = vmatpush2.msra.mxu0 0.0
  %88 = vmatprep.subr.mxu0 0.0
  %89 = vmatpush2.msra.mxu0 0.0
  %90 = vmatprep.subr.mxu0 0.0
  %91 = vmatpush2.msra.mxu0 0.0
  %92 = vmatprep.subr.mxu0 0.0
  %93 = vmatpush2.msra.mxu0 0.0
  %94 = vmatprep.subr.mxu0 0.0
  %95 = vmatpush2.msra.mxu0 0.0
  %96 = vmatprep.subr.mxu0 0.0
  %97 = vmatpush2.msra.mxu0 0.0
  %98 = vmatprep.mubr.f32.mxu0 0.0
  %99 = vmatmul.mubr.f32.gmra.mxu0 %v29
  %v100 = vpop.f32.mrf.mxu0
  %v101 = vadd.f32 %v25, %v100
  %v102 = vpop.f32.mrf.mxu0
  %103 = vmatprep.mubr.f32.mxu0 0.0
  %104 = vmatmul.mubr.f32.gmra.mxu0 %v32
  %v105 = vpop.f32.mrf.mxu0
  %v106 = vadd.f32 %v25, %v105
  %v107 = vpop.f32.mrf.mxu0
  %108 = vdwg.mxu0
  %v109 = vmul.f32 %v101, %v101
  %v110 = vmul.f32 %v106, %v106
  %v111 = vmul.f32 %v101, %v109
  %v112 = vmul.f32 %v106, %v110
  %v113 = vmul.f32 %v111, 0.044715
  %v114 = vmul.f32 %v112, 0.044715
  %v115 = vadd.f32 %v101, %v113
  %v116 = vadd.f32 %v106, %v114
  %v117 = vmul.f32 %v115, 0.7978846
  %v118 = vmul.f32 %v116, 0.7978846
  %v119 = vtanh.pop %v117
  %v120 = vtanh.pop %v118
  %v121 = vadd.f32 %v119, 1.0
  %v122 = vadd.f32 %v120, 1.0
  %v123 = vmul.f32 %v121, 0.5
  %v124 = vmul.f32 %v122, 0.5
  %v125 = vmul.f32 %v101, %v123
  %v126 = vmul.f32 %v106, %v124
  %127 = vst [vmem:[%s3] sm:$0xff] %v125
  %128 = vst [vmem:[%s3 + $0x8] sm:$0xff] %v126
  // Predicated region
  $region14: #{block_forward.29} parent=0 // pred_check
    _
  $region15: #{block_forward.29} parent=0 // pred_check_branch
    %130 = sbr.rel (0) target = $region17
  $region16: #{block_forward.29} parent=0 // pred_region
    _
  $region17: #{block_forward.29} parent=0 // pred_fallthru
    _
  // Predicated region
  $region18: #{block_forward.29} parent=0 // pred_check
    _
  $region19: #{block_forward.29} parent=0 // pred_check_branch
    %132 = sbr.rel (0) target = $region21
  $region20: #{block_forward.29} parent=0 // pred_region
    _
  $region21: #{block_forward.29} parent=0 // pred_fallthru
    _

// kernel: block_forward.30
$region0: #{block_forward.30}
  #allocation0 [shape = 'u32[]', space=smem, size = 0x4, offset = 0x4, fixed_abs, tag = 'smem constant byte address 0x4 - core index']
  #allocation1 [shape = 'u32[144,128]{1,0:T(1,128)}', space=vmem, size = 0x12000, scoped, tag = 'internal scratch']
  %s0 = inlined_call_operand.vmem [shape: f32[16,128], index: 0, kind: input, shape index: {}]
  %s1 = inlined_call_operand.vmem [shape: f32[128,32], index: 1, kind: input, shape index: {}]
  %s2 = inlined_call_operand.vmem [shape: f32[1,32], index: 2, kind: input, shape index: {}]
  %s3 = inlined_call_operand.vmem [shape: f32[16,32], index: 3, kind: output, shape index: {}]
  %s4 = sld [smem:[#allocation0]]
  $region22: #{block_forward.30} parent=0
    _
  %s6 = ssub.s32 1, %s4
  %s7 = scalar_select 0, %s6, %s4
  // Predicated region
  $region2: #{block_forward.30} parent=0 // pred_check
    _
  $region3: #{block_forward.30} parent=0 // pred_check_branch
    %9 = sbr.rel (0) target = $region5
  $region4: #{block_forward.30} parent=0 // pred_region
    _
  $region5: #{block_forward.30} parent=0 // pred_fallthru
    _
  // Predicated region
  $region6: #{block_forward.30} parent=0 // pred_check
    _
  $region7: #{block_forward.30} parent=0 // pred_check_branch
    %11 = sbr.rel (0) target = $region9
  $region8: #{block_forward.30} parent=0 // pred_region
    _
  $region9: #{block_forward.30} parent=0 // pred_fallthru
    _
  // Predicated region
  $region10: #{block_forward.30} parent=0 // pred_check
    _
  $region11: #{block_forward.30} parent=0 // pred_check_branch
    %13 = sbr.rel (0) target = $region13
  $region12: #{block_forward.30} parent=0 // pred_region
    _
  $region13: #{block_forward.30} parent=0 // pred_fallthru
    _
  %v14 = vld [vmem:[%s0] sm:$0xff]
  %v15 = vld [vmem:[%s0 + $0x8] sm:$0xff]
  %v16 = vld [vmem:[%s1] sm:$0xff]
  %v17 = vld [vmem:[%s1 + $0x8] sm:$0xff]
  %v18 = vld [vmem:[%s1 + $0x10] sm:$0xff]
  %v19 = vld [vmem:[%s1 + $0x18] sm:$0xff]
  %v20 = vld [vmem:[%s1 + $0x20] sm:$0xff]
  %v21 = vld [vmem:[%s1 + $0x28] sm:$0xff]
  %v22 = vld [vmem:[%s1 + $0x30] sm:$0xff]
  %v23 = vld [vmem:[%s1 + $0x38] sm:$0xff]
  %v24 = vld [vmem:[%s1 + $0x40] sm:$0xff]
  %v25 = vld [vmem:[%s1 + $0x48] sm:$0xff]
  %v26 = vld [vmem:[%s1 + $0x50] sm:$0xff]
  %v27 = vld [vmem:[%s1 + $0x58] sm:$0xff]
  %v28 = vld [vmem:[%s1 + $0x60] sm:$0xff]
  %v29 = vld [vmem:[%s1 + $0x68] sm:$0xff]
  %v30 = vld [vmem:[%s1 + $0x70] sm:$0xff]
  %v31 = vld [vmem:[%s1 + $0x78] sm:$0xff]
  %v32 = vld [vmem:[%s2] sm:$0x1]
  %v34 = vlaneseq
  %v35 = vshrl.u32 %v34, 7
  %v36 = vsub.s32 0, %v35
  %v37 = vrot.slane %v32, %v36
  %39 = vmatprep.subr.mxu0 0.0
  %40 = vmatpush1.msra.mxu0 %v31
  %41 = vmatprep.subr.mxu0 0.0
  %42 = vmatpush1.msra.mxu0 %v30
  %43 = vmatprep.subr.mxu0 0.0
  %44 = vmatpush1.msra.mxu0 %v29
  %45 = vmatprep.subr.mxu0 0.0
  %46 = vmatpush1.msra.mxu0 %v28
  %47 = vmatprep.subr.mxu0 0.0
  %48 = vmatpush1.msra.mxu0 %v27
  %49 = vmatprep.subr.mxu0 0.0
  %50 = vmatpush1.msra.mxu0 %v26
  %51 = vmatprep.subr.mxu0 0.0
  %52 = vmatpush1.msra.mxu0 %v25
  %53 = vmatprep.subr.mxu0 0.0
  %54 = vmatpush1.msra.mxu0 %v24
  %55 = vmatprep.subr.mxu0 0.0
  %56 = vmatpush1.msra.mxu0 %v23
  %57 = vmatprep.subr.mxu0 0.0
  %58 = vmatpush1.msra.mxu0 %v22
  %59 = vmatprep.subr.mxu0 0.0
  %60 = vmatpush1.msra.mxu0 %v21
  %61 = vmatprep.subr.mxu0 0.0
  %62 = vmatpush1.msra.mxu0 %v20
  %63 = vmatprep.subr.mxu0 0.0
  %64 = vmatpush1.msra.mxu0 %v19
  %65 = vmatprep.subr.mxu0 0.0
  %66 = vmatpush1.msra.mxu0 %v18
  %67 = vmatprep.subr.mxu0 0.0
  %68 = vmatpush1.msra.mxu0 %v17
  %69 = vmatprep.subr.mxu0 0.0
  %70 = vmatpush1.msra.mxu0 %v16
  %71 = vmatprep.subr.mxu0 0.0
  %72 = vmatpush2.msra.mxu0 0.0
  %73 = vmatprep.subr.mxu0 0.0
  %74 = vmatpush2.msra.mxu0 0.0
  %75 = vmatprep.subr.mxu0 0.0
  %76 = vmatpush2.msra.mxu0 0.0
  %77 = vmatprep.subr.mxu0 0.0
  %78 = vmatpush2.msra.mxu0 0.0
  %79 = vmatprep.subr.mxu0 0.0
  %80 = vmatpush2.msra.mxu0 0.0
  %81 = vmatprep.subr.mxu0 0.0
  %82 = vmatpush2.msra.mxu0 0.0
  %83 = vmatprep.subr.mxu0 0.0
  %84 = vmatpush2.msra.mxu0 0.0
  %85 = vmatprep.subr.mxu0 0.0
  %86 = vmatpush2.msra.mxu0 0.0
  %87 = vmatprep.subr.mxu0 0.0
  %88 = vmatpush2.msra.mxu0 0.0
  %89 = vmatprep.subr.mxu0 0.0
  %90 = vmatpush2.msra.mxu0 0.0
  %91 = vmatprep.subr.mxu0 0.0
  %92 = vmatpush2.msra.mxu0 0.0
  %93 = vmatprep.subr.mxu0 0.0
  %94 = vmatpush2.msra.mxu0 0.0
  %95 = vmatprep.subr.mxu0 0.0
  %96 = vmatpush2.msra.mxu0 0.0
  %97 = vmatprep.subr.mxu0 0.0
  %98 = vmatpush2.msra.mxu0 0.0
  %99 = vmatprep.subr.mxu0 0.0
  %100 = vmatpush2.msra.mxu0 0.0
  %101 = vmatprep.subr.mxu0 0.0
  %102 = vmatpush2.msra.mxu0 0.0
  %103 = vmatprep.mubr.f32.mxu0 0.0
  %104 = vmatmul.mubr.f32.gmra.mxu0 %v14
  %v105 = vpop.f32.mrf.mxu0
  %v106 = vadd.f32 %v37, %v105
  %v107 = vpop.f32.mrf.mxu0
  %108 = vmatprep.mubr.f32.mxu0 0.0
  %109 = vmatmul.mubr.f32.gmra.mxu0 %v15
  %v110 = vpop.f32.mrf.mxu0
  %v111 = vadd.f32 %v37, %v110
  %v112 = vpop.f32.mrf.mxu0
  %113 = vdwg.mxu0
  %vm114 = vcmask 261120
  %115 = vst.msk [vmem:[%s3] sm:$0xff] %vm114, %v106
  %116 = vst.msk [vmem:[%s3 + $0x8] sm:$0xff] %vm114, %v111
  // Predicated region
  $region14: #{block_forward.30} parent=0 // pred_check
    _
  $region15: #{block_forward.30} parent=0 // pred_check_branch
    %118 = sbr.rel (0) target = $region17
  $region16: #{block_forward.30} parent=0 // pred_region
    _
  $region17: #{block_forward.30} parent=0 // pred_fallthru
    _
  // Predicated region
  $region18: #{block_forward.30} parent=0 // pred_check
    _
  $region19: #{block_forward.30} parent=0 // pred_check_branch
    %120 = sbr.rel (0) target = $region21
  $region20: #{block_forward.30} parent=0 // pred_region
    _
  $region21: #{block_forward.30} parent=0 // pred_fallthru
    _

</llo_original>
